<compile_context>
chip_gen: v7x
topology: tpu7x:2x2x1
jax: 0.10.0
libtpu: 0.0.40
codegen_flags: <defaults>
</compile_context>

<pallas_src>
import jax
import jax.numpy as jnp
from jax.experimental import pallas as pl
from jax.experimental.pallas import tpu as pltpu

LN_EPS = 1e-5
_INV_SQRT2 = 0.7071067811865476


def _round_up(n, m):
    return ((n + m - 1) // m) * m


def _pad_to(a, shape):
    pads = [(0, t - s) for s, t in zip(a.shape, shape)]
    if all(p == (0, 0) for p in pads):
        return a
    return jnp.pad(a, pads)


def _pick_batch_tile(batch, s_pad, target_rows=128):
    """Largest divisor Bt of batch with Bt*S_pad <= target_rows, while keeping
    >= 2 grid steps (megacore) whenever batch >= 2."""
    best = 1
    for bt in range(1, batch + 1):
        if batch % bt:
            continue
        if bt > 1 and bt * s_pad > target_rows:
            continue
        if bt > 1 and batch >= 2 and batch // bt < 2:
            continue
        best = bt
    return best


# ---------------------------------------------------------------- kernel ----
def _erf_approx(x):
    # Abramowitz & Stegun 7.1.26, |err| < 1.5e-7 -> exact-erf GELU to f32 noise.
    a1, a2, a3, a4, a5 = 0.254829592, -0.284496736, 1.421413741, -1.453152027, 1.061405429
    p = 0.3275911
    sgn = jnp.where(x >= 0.0, 1.0, -1.0)
    ax = jnp.abs(x)
    t = 1.0 / (1.0 + p * ax)
    poly = t * (a1 + t * (a2 + t * (a3 + t * (a4 + t * a5))))
    return sgn * (1.0 - poly * jnp.exp(-ax * ax))


def _gelu_exact(x):
    return 0.5 * x * (1.0 + _erf_approx(x * _INV_SQRT2))


def _wgmlp_kernel(x_ref, uw1_ref, uw2_ref, ub1_ref, ub2_ref, g_ref, be_ref,
                  ww_ref, wb_ref, vw_ref, vb_ref, o_ref):
    # x_ref: (Bt, Sp, Fp) bf16;  uw1/uw2: (Fp, half) bf16;  ww: (half, Sp) bf16
    # vw: (half, Fp) bf16;  biases / LN params: f32;  o_ref: (Bt, Sp, Fp) f32
    bt, sp, fp = x_ref.shape
    half = ww_ref.shape[0]
    f32 = jnp.float32
    bf16 = jnp.bfloat16

    x = x_ref[...].reshape(bt * sp, fp)                               # (M, Fp) bf16

    # U projection, pre-split into chunk halves (no lane-dim slice of h).
    z1 = jnp.dot(x, uw1_ref[...], preferred_element_type=f32) + ub1_ref[...]
    z2 = jnp.dot(x, uw2_ref[...], preferred_element_type=f32) + ub2_ref[...]
    z1 = _gelu_exact(z1)                                              # (M, half) f32
    z2 = _gelu_exact(z2)

    # LayerNorm(z2) over the feature dim (population variance, eps inside rsqrt).
    inv_n = 1.0 / half
    mu = jnp.sum(z2, axis=-1, keepdims=True) * inv_n
    d = z2 - mu
    var = jnp.sum(d * d, axis=-1, keepdims=True) * inv_n
    z2n = d * jax.lax.rsqrt(var + LN_EPS) * g_ref[...] + be_ref[...]

    # to_weight: (M, half) @ (half, Sp) -> (M, Sp), f32 accumulation.
    w = jnp.dot(z2n.astype(bf16), ww_ref[...], preferred_element_type=f32) + wb_ref[...]

    # Spatial gating, per sequence: (Sp, Sp) @ (Sp, half).
    gated = jnp.einsum('bij,bjf->bif',
                       w.reshape(bt, sp, sp).astype(bf16),
                       z1.reshape(bt, sp, half).astype(bf16),
                       preferred_element_type=f32)
    gated = gated.reshape(bt * sp, half).astype(bf16)

    # V projection + write (lane-dense Fp).
    y = jnp.dot(gated, vw_ref[...], preferred_element_type=f32) + vb_ref[...]
    o_ref[...] = y.reshape(bt, sp, fp)


# --------------------------------------------------------------- wrapper ----
def weight_gated_mlp(x, params):
    """x: (B, S, F) float32.  params from init_params().  Returns (B, S, F) f32."""
    uw, ub, gamma, beta, ww, wb, vw, vb = params
    B, S, F = x.shape
    FFN = uw.shape[1]
    assert FFN % 2 == 0, "ffn_features must be even"
    half = FFN // 2
    assert ww.shape == (half, S), "seq_len of to_weight must equal input seq length"

    s_pad = _round_up(S, 8)          # sublane-aligned rows
    f_pad = _round_up(F, 128)        # lane-dense feature dim (unmasked stores)
    bt = _pick_batch_tile(B, s_pad)  # fold batches to fill the MXU M dim
    nb = B // bt

    # Split U into chunk halves, zero-pad to aligned shapes, bf16 MXU operands.
    x_p = _pad_to(x, (B, s_pad, f_pad)).astype(jnp.bfloat16)
    uw1 = _pad_to(uw[:, :half], (f_pad, half)).astype(jnp.bfloat16)
    uw2 = _pad_to(uw[:, half:], (f_pad, half)).astype(jnp.bfloat16)
    ub1, ub2 = ub[:, :half], ub[:, half:]
    ww_p = _pad_to(ww, (half, s_pad)).astype(jnp.bfloat16)   # padded cols are 0
    wb_p = _pad_to(wb, (1, s_pad))
    vw_p = _pad_to(vw, (half, f_pad)).astype(jnp.bfloat16)
    vb_p = _pad_to(vb, (1, f_pad))
    args = (x_p, uw1, uw2, ub1, ub2, gamma, beta, ww_p, wb_p, vw_p, vb_p)

    flops = 2 * B * S * (F * FFN + 2 * S * half + half * F)
    transcendentals = B * S * (FFN + 1)              # exp per GELU element + rsqrt
    bytes_accessed = (sum(int(a.size) * a.dtype.itemsize for a in args)
                      + B * s_pad * f_pad * 4)
    cost = pl.CostEstimate(flops=flops, transcendentals=transcendentals,
                           bytes_accessed=bytes_accessed)

    def build(single_buffer_weights):
        def const_spec(shape):
            idx = lambda b: (0,) * len(shape)
            if single_buffer_weights:
                # Constant-index blocks never change -> no double buffering.
                return pl.BlockSpec(shape, idx, pipeline_mode=pl.Buffered(1))
            return pl.BlockSpec(shape, idx)

        return pl.pallas_call(
            _wgmlp_kernel,
            out_shape=jax.ShapeDtypeStruct((B, s_pad, f_pad), jnp.float32),
            grid=(nb,),
            in_specs=[
                pl.BlockSpec((bt, s_pad, f_pad), lambda b: (b, 0, 0)),  # x
                const_spec((f_pad, half)),                              # U_w (1st half)
                const_spec((f_pad, half)),                              # U_w (2nd half)
                const_spec((1, half)),                                  # U_b (1st half)
                const_spec((1, half)),                                  # U_b (2nd half)
                const_spec((1, half)),                                  # LN gamma
                const_spec((1, half)),                                  # LN beta
                const_spec((half, s_pad)),                              # to_weight w
                const_spec((1, s_pad)),                                 # to_weight b
                const_spec((half, f_pad)),                              # V_w
                const_spec((1, f_pad)),                                 # V_b
            ],
            out_specs=pl.BlockSpec((bt, s_pad, f_pad), lambda b: (b, 0, 0)),
            compiler_params=pltpu.CompilerParams(
                dimension_semantics=("parallel",),       # megacore on v7x
                vmem_limit_bytes=64 * 1024 * 1024),
            cost_estimate=cost,
        )

    try:
        y_pad = build(single_buffer_weights=True)(*args)
    except Exception:
        # pipeline_mode / Buffered(1) unsupported in this jax build -> default buffering.
        y_pad = build(single_buffer_weights=False)(*args)

    return y_pad[:, :S, :F]


# ------------------------------------------------------------ init & ref ----
def init_params(key, seq_len, features, ffn_features):
    assert ffn_features % 2 == 0
    half = ffn_features // 2
    ks = jax.random.split(key, 6)

    def linear(kw, kb, fin, fout):
        bound = 1.0 / float(fin) ** 0.5                 # PyTorch nn.Linear init
        w = jax.random.uniform(kw, (fin, fout), jnp.float32, -bound, bound)
        b = jax.random.uniform(kb, (1, fout), jnp.float32, -bound, bound)
        return w, b

    uw, ub = linear(ks[0], ks[1], features, ffn_features)   # U
    ww, wb = linear(ks[2], ks[3], half, seq_len)            # to_weight
    vw, vb = linear(ks[4], ks[5], half, features)           # V
    gamma = jnp.ones((1, half), jnp.float32)                # LayerNorm affine
    beta = jnp.zeros((1, half), jnp.float32)
    return (uw, ub, gamma, beta, ww, wb, vw, vb)


def _reference(x, params, mxu_bf16):
    """Pure-JAX reference. mxu_bf16=True mirrors the kernel's mixed precision
    (bf16 matmul operands, f32 accumulation); False = full-f32 HIGHEST."""
    uw, ub, gamma, beta, ww, wb, vw, vb = params
    half = ww.shape[0]
    if mxu_bf16:
        c = lambda a: a.astype(jnp.bfloat16)
        prec = None
    else:
        c = lambda a: a
        prec = jax.lax.Precision.HIGHEST

    def mm(eq, a, b):
        return jnp.einsum(eq, c(a), c(b), precision=prec,
                          preferred_element_type=jnp.float32)

    z1 = jax.nn.gelu(mm('bsf,fh->bsh', x, uw[:, :half]) + ub[:, :half], approximate=False)
    z2 = jax.nn.gelu(mm('bsf,fh->bsh', x, uw[:, half:]) + ub[:, half:], approximate=False)
    mu = jnp.mean(z2, axis=-1, keepdims=True)
    var = jnp.mean((z2 - mu) ** 2, axis=-1, keepdims=True)
    z2n = (z2 - mu) * jax.lax.rsqrt(var + LN_EPS) * gamma + beta
    w = mm('bsh,hk->bsk', z2n, ww) + wb
    gated = mm('bij,bjf->bif', w, z1)
    return mm('bsh,hf->bsf', gated, vw) + vb


# ------------------------------------------------------------------ main ----
if __name__ == "__main__":
    key = jax.random.PRNGKey(0)
    kx, kp = jax.random.split(key)

    B, S, F, FFN = 2, 8, 32, 64          # batch, seq_len, features, ffn_features
    x = jax.random.normal(kx, (B, S, F), jnp.float32)
    params = init_params(kp, seq_len=S, features=F, ffn_features=FFN)

    y = weight_gated_mlp(x, params)
    jax.block_until_ready(y)

    assert y.shape == (B, S, F), y.shape
    assert y.dtype == jnp.float32, y.dtype

    # Primary correctness check: reference with matched mixed precision.
    y_match = _reference(x, params, mxu_bf16=True)
    err_match = float(jnp.max(jnp.abs(y - y_match)))
    assert err_match < 2e-3, f"max abs err vs matched-precision reference: {err_match}"

    # Sanity check vs full-f32 reference (bounds the bf16 mixed-precision drift).
    y_full = _reference(x, params, mxu_bf16=False)
    err_full = float(jnp.max(jnp.abs(y - y_full)))
    assert err_full < 1e-1, f"max abs err vs f32 reference: {err_full}"

    print("KERNEL_OK")
</pallas_src>

<mosaic_0001>
module attributes {stable_mosaic.version = 11 : i64} {
  func.func @_wgmlp_kernel(%arg0: i32, %arg1: memref<1x8x128xbf16, #tpu.memory_space<vmem>>, %arg2: memref<128x32xbf16, #tpu.memory_space<vmem>>, %arg3: memref<128x32xbf16, #tpu.memory_space<vmem>>, %arg4: memref<1x32xf32, #tpu.memory_space<vmem>>, %arg5: memref<1x32xf32, #tpu.memory_space<vmem>>, %arg6: memref<1x32xf32, #tpu.memory_space<vmem>>, %arg7: memref<1x32xf32, #tpu.memory_space<vmem>>, %arg8: memref<32x8xbf16, #tpu.memory_space<vmem>>, %arg9: memref<1x8xf32, #tpu.memory_space<vmem>>, %arg10: memref<32x128xbf16, #tpu.memory_space<vmem>>, %arg11: memref<1x128xf32, #tpu.memory_space<vmem>>, %arg12: memref<1x8x128xf32, #tpu.memory_space<vmem>>) attributes {dimension_semantics = [#tpu.dimension_semantics<parallel>], iteration_bounds = array<i64: 2>, scalar_prefetch = 0 : i64, scratch_operands = 0 : i64, tpu.core_type = #tpu.core_type<tc>, window_params = [{transform_indices = @transform_0, window_bounds = array<i64: 1, 8, 128>}, {pipeline_mode = #tpu.pipeline_mode<synchronous>, transform_indices = @transform_1, window_bounds = array<i64: 128, 32>}, {pipeline_mode = #tpu.pipeline_mode<synchronous>, transform_indices = @transform_2, window_bounds = array<i64: 128, 32>}, {pipeline_mode = #tpu.pipeline_mode<synchronous>, transform_indices = @transform_3, window_bounds = array<i64: 1, 32>}, {pipeline_mode = #tpu.pipeline_mode<synchronous>, transform_indices = @transform_4, window_bounds = array<i64: 1, 32>}, {pipeline_mode = #tpu.pipeline_mode<synchronous>, transform_indices = @transform_5, window_bounds = array<i64: 1, 32>}, {pipeline_mode = #tpu.pipeline_mode<synchronous>, transform_indices = @transform_6, window_bounds = array<i64: 1, 32>}, {pipeline_mode = #tpu.pipeline_mode<synchronous>, transform_indices = @transform_7, window_bounds = array<i64: 32, 8>}, {pipeline_mode = #tpu.pipeline_mode<synchronous>, transform_indices = @transform_8, window_bounds = array<i64: 1, 8>}, {pipeline_mode = #tpu.pipeline_mode<synchronous>, transform_indices = @transform_9, window_bounds = array<i64: 32, 128>}, {pipeline_mode = #tpu.pipeline_mode<synchronous>, transform_indices = @transform_10, window_bounds = array<i64: 1, 128>}, {transform_indices = @transform_11, window_bounds = array<i64: 1, 8, 128>}]} {
    %c0 = arith.constant 0 : index
    %c0_0 = arith.constant 0 : index
    %c0_1 = arith.constant 0 : index
    %0 = vector.load %arg1[%c0, %c0_0, %c0_1] : memref<1x8x128xbf16, #tpu.memory_space<vmem>>, vector<1x8x128xbf16>
    %1 = vector.shape_cast %0 : vector<1x8x128xbf16> to vector<8x128xbf16>
    %c0_2 = arith.constant 0 : index
    %c0_3 = arith.constant 0 : index
    %2 = vector.load %arg2[%c0_2, %c0_3] : memref<128x32xbf16, #tpu.memory_space<vmem>>, vector<128x32xbf16>
    %cst = arith.constant dense<0.000000e+00> : vector<8x32xf32>
    %3 = tpu.matmul %1, %2, %cst {dimension_numbers = #tpu.dot_dimension_numbers<[1], [0], [0], [1], [0, 0, 1, 1], [], []>} : vector<8x128xbf16>, vector<128x32xbf16>, vector<8x32xf32> -> vector<8x32xf32>
    %c0_4 = arith.constant 0 : index
    %c0_5 = arith.constant 0 : index
    %4 = vector.load %arg4[%c0_4, %c0_5] : memref<1x32xf32, #tpu.memory_space<vmem>>, vector<1x32xf32>
    %5 = vector.broadcast %4 : vector<1x32xf32> to vector<8x32xf32>
    %6 = arith.addf %3, %5 : vector<8x32xf32>
    %c0_6 = arith.constant 0 : index
    %c0_7 = arith.constant 0 : index
    %7 = vector.load %arg3[%c0_6, %c0_7] : memref<128x32xbf16, #tpu.memory_space<vmem>>, vector<128x32xbf16>
    %cst_8 = arith.constant dense<0.000000e+00> : vector<8x32xf32>
    %8 = tpu.matmul %1, %7, %cst_8 {dimension_numbers = #tpu.dot_dimension_numbers<[1], [0], [0], [1], [0, 0, 1, 1], [], []>} : vector<8x128xbf16>, vector<128x32xbf16>, vector<8x32xf32> -> vector<8x32xf32>
    %c0_9 = arith.constant 0 : index
    %c0_10 = arith.constant 0 : index
    %9 = vector.load %arg5[%c0_9, %c0_10] : memref<1x32xf32, #tpu.memory_space<vmem>>, vector<1x32xf32>
    %10 = vector.broadcast %9 : vector<1x32xf32> to vector<8x32xf32>
    %11 = arith.addf %8, %10 : vector<8x32xf32>
    %cst_11 = arith.constant 5.000000e-01 : f32
    %12 = vector.broadcast %cst_11 : f32 to vector<8x32xf32>
    %13 = arith.mulf %12, %6 : vector<8x32xf32>
    %cst_12 = arith.constant 0.707106769 : f32
    %14 = vector.broadcast %cst_12 : f32 to vector<8x32xf32>
    %15 = arith.mulf %6, %14 : vector<8x32xf32>
    %cst_13 = arith.constant 0.000000e+00 : f32
    %16 = vector.broadcast %cst_13 : f32 to vector<8x32xf32>
    %17 = arith.cmpf oge, %15, %16 : vector<8x32xf32>
    %cst_14 = arith.constant 1.000000e+00 : f32
    %cst_15 = arith.constant -1.000000e+00 : f32
    %18 = vector.broadcast %cst_14 : f32 to vector<8x32xf32>
    %19 = vector.broadcast %cst_15 : f32 to vector<8x32xf32>
    %20 = arith.select %17, %18, %19 : vector<8x32xi1>, vector<8x32xf32>
    %21 = math.absf %15 : vector<8x32xf32>
    %cst_16 = arith.constant 0.327591091 : f32
    %22 = vector.broadcast %cst_16 : f32 to vector<8x32xf32>
    %23 = arith.mulf %22, %21 : vector<8x32xf32>
    %cst_17 = arith.constant 1.000000e+00 : f32
    %24 = vector.broadcast %cst_17 : f32 to vector<8x32xf32>
    %25 = arith.addf %24, %23 : vector<8x32xf32>
    %cst_18 = arith.constant 1.000000e+00 : f32
    %26 = vector.broadcast %cst_18 : f32 to vector<8x32xf32>
    %27 = arith.divf %26, %25 : vector<8x32xf32>
    %cst_19 = arith.constant 1.06140542 : f32
    %28 = vector.broadcast %cst_19 : f32 to vector<8x32xf32>
    %29 = arith.mulf %27, %28 : vector<8x32xf32>
    %cst_20 = arith.constant -1.45315206 : f32
    %30 = vector.broadcast %cst_20 : f32 to vector<8x32xf32>
    %31 = arith.addf %30, %29 : vector<8x32xf32>
    %32 = arith.mulf %27, %31 : vector<8x32xf32>
    %cst_21 = arith.constant 1.42141378 : f32
    %33 = vector.broadcast %cst_21 : f32 to vector<8x32xf32>
    %34 = arith.addf %33, %32 : vector<8x32xf32>
    %35 = arith.mulf %27, %34 : vector<8x32xf32>
    %cst_22 = arith.constant -0.284496725 : f32
    %36 = vector.broadcast %cst_22 : f32 to vector<8x32xf32>
    %37 = arith.addf %36, %35 : vector<8x32xf32>
    %38 = arith.mulf %27, %37 : vector<8x32xf32>
    %cst_23 = arith.constant 0.254829586 : f32
    %39 = vector.broadcast %cst_23 : f32 to vector<8x32xf32>
    %40 = arith.addf %39, %38 : vector<8x32xf32>
    %41 = arith.mulf %27, %40 : vector<8x32xf32>
    %cst_24 = arith.constant 0.000000e+00 : f32
    %42 = vector.broadcast %cst_24 : f32 to vector<8x32xf32>
    %43 = arith.subf %42, %21 : vector<8x32xf32>
    %44 = arith.mulf %43, %21 : vector<8x32xf32>
    %45 = math.exp %44 : vector<8x32xf32>
    %46 = arith.mulf %41, %45 : vector<8x32xf32>
    %cst_25 = arith.constant 1.000000e+00 : f32
    %47 = vector.broadcast %cst_25 : f32 to vector<8x32xf32>
    %48 = arith.subf %47, %46 : vector<8x32xf32>
    %49 = arith.mulf %20, %48 : vector<8x32xf32>
    %cst_26 = arith.constant 1.000000e+00 : f32
    %50 = vector.broadcast %cst_26 : f32 to vector<8x32xf32>
    %51 = arith.addf %50, %49 : vector<8x32xf32>
    %52 = arith.mulf %13, %51 : vector<8x32xf32>
    %cst_27 = arith.constant 5.000000e-01 : f32
    %53 = vector.broadcast %cst_27 : f32 to vector<8x32xf32>
    %54 = arith.mulf %53, %11 : vector<8x32xf32>
    %cst_28 = arith.constant 0.707106769 : f32
    %55 = vector.broadcast %cst_28 : f32 to vector<8x32xf32>
    %56 = arith.mulf %11, %55 : vector<8x32xf32>
    %cst_29 = arith.constant 0.000000e+00 : f32
    %57 = vector.broadcast %cst_29 : f32 to vector<8x32xf32>
    %58 = arith.cmpf oge, %56, %57 : vector<8x32xf32>
    %cst_30 = arith.constant 1.000000e+00 : f32
    %cst_31 = arith.constant -1.000000e+00 : f32
    %59 = vector.broadcast %cst_30 : f32 to vector<8x32xf32>
    %60 = vector.broadcast %cst_31 : f32 to vector<8x32xf32>
    %61 = arith.select %58, %59, %60 : vector<8x32xi1>, vector<8x32xf32>
    %62 = math.absf %56 : vector<8x32xf32>
    %cst_32 = arith.constant 0.327591091 : f32
    %63 = vector.broadcast %cst_32 : f32 to vector<8x32xf32>
    %64 = arith.mulf %63, %62 : vector<8x32xf32>
    %cst_33 = arith.constant 1.000000e+00 : f32
    %65 = vector.broadcast %cst_33 : f32 to vector<8x32xf32>
    %66 = arith.addf %65, %64 : vector<8x32xf32>
    %cst_34 = arith.constant 1.000000e+00 : f32
    %67 = vector.broadcast %cst_34 : f32 to vector<8x32xf32>
    %68 = arith.divf %67, %66 : vector<8x32xf32>
    %cst_35 = arith.constant 1.06140542 : f32
    %69 = vector.broadcast %cst_35 : f32 to vector<8x32xf32>
    %70 = arith.mulf %68, %69 : vector<8x32xf32>
    %cst_36 = arith.constant -1.45315206 : f32
    %71 = vector.broadcast %cst_36 : f32 to vector<8x32xf32>
    %72 = arith.addf %71, %70 : vector<8x32xf32>
    %73 = arith.mulf %68, %72 : vector<8x32xf32>
    %cst_37 = arith.constant 1.42141378 : f32
    %74 = vector.broadcast %cst_37 : f32 to vector<8x32xf32>
    %75 = arith.addf %74, %73 : vector<8x32xf32>
    %76 = arith.mulf %68, %75 : vector<8x32xf32>
    %cst_38 = arith.constant -0.284496725 : f32
    %77 = vector.broadcast %cst_38 : f32 to vector<8x32xf32>
    %78 = arith.addf %77, %76 : vector<8x32xf32>
    %79 = arith.mulf %68, %78 : vector<8x32xf32>
    %cst_39 = arith.constant 0.254829586 : f32
    %80 = vector.broadcast %cst_39 : f32 to vector<8x32xf32>
    %81 = arith.addf %80, %79 : vector<8x32xf32>
    %82 = arith.mulf %68, %81 : vector<8x32xf32>
    %cst_40 = arith.constant 0.000000e+00 : f32
    %83 = vector.broadcast %cst_40 : f32 to vector<8x32xf32>
    %84 = arith.subf %83, %62 : vector<8x32xf32>
    %85 = arith.mulf %84, %62 : vector<8x32xf32>
    %86 = math.exp %85 : vector<8x32xf32>
    %87 = arith.mulf %82, %86 : vector<8x32xf32>
    %cst_41 = arith.constant 1.000000e+00 : f32
    %88 = vector.broadcast %cst_41 : f32 to vector<8x32xf32>
    %89 = arith.subf %88, %87 : vector<8x32xf32>
    %90 = arith.mulf %61, %89 : vector<8x32xf32>
    %cst_42 = arith.constant 1.000000e+00 : f32
    %91 = vector.broadcast %cst_42 : f32 to vector<8x32xf32>
    %92 = arith.addf %91, %90 : vector<8x32xf32>
    %93 = arith.mulf %54, %92 : vector<8x32xf32>
    %cst_43 = arith.constant dense<0.000000e+00> : vector<8xf32>
    %94 = vector.multi_reduction <add>, %93, %cst_43 [1] : vector<8x32xf32> to vector<8xf32>
    %95 = vector.shape_cast %94 : vector<8xf32> to vector<8x1xf32>
    %cst_44 = arith.constant 3.125000e-02 : f32
    %96 = vector.broadcast %cst_44 : f32 to vector<8x1xf32>
    %97 = arith.mulf %95, %96 : vector<8x1xf32>
    %98 = vector.broadcast %97 : vector<8x1xf32> to vector<8x32xf32>
    %99 = arith.subf %93, %98 : vector<8x32xf32>
    %100 = arith.mulf %99, %99 : vector<8x32xf32>
    %cst_45 = arith.constant dense<0.000000e+00> : vector<8xf32>
    %101 = vector.multi_reduction <add>, %100, %cst_45 [1] : vector<8x32xf32> to vector<8xf32>
    %102 = vector.shape_cast %101 : vector<8xf32> to vector<8x1xf32>
    %cst_46 = arith.constant 3.125000e-02 : f32
    %103 = vector.broadcast %cst_46 : f32 to vector<8x1xf32>
    %104 = arith.mulf %102, %103 : vector<8x1xf32>
    %cst_47 = arith.constant 9.99999974E-6 : f32
    %105 = vector.broadcast %cst_47 : f32 to vector<8x1xf32>
    %106 = arith.addf %104, %105 : vector<8x1xf32>
    %107 = math.rsqrt %106 : vector<8x1xf32>
    %108 = vector.broadcast %107 : vector<8x1xf32> to vector<8x32xf32>
    %109 = arith.mulf %99, %108 : vector<8x32xf32>
    %c0_48 = arith.constant 0 : index
    %c0_49 = arith.constant 0 : index
    %110 = vector.load %arg6[%c0_48, %c0_49] : memref<1x32xf32, #tpu.memory_space<vmem>>, vector<1x32xf32>
    %111 = vector.broadcast %110 : vector<1x32xf32> to vector<8x32xf32>
    %112 = arith.mulf %109, %111 : vector<8x32xf32>
    %c0_50 = arith.constant 0 : index
    %c0_51 = arith.constant 0 : index
    %113 = vector.load %arg7[%c0_50, %c0_51] : memref<1x32xf32, #tpu.memory_space<vmem>>, vector<1x32xf32>
    %114 = vector.broadcast %113 : vector<1x32xf32> to vector<8x32xf32>
    %115 = arith.addf %112, %114 : vector<8x32xf32>
    %116 = arith.truncf %115 : vector<8x32xf32> to vector<8x32xbf16>
    %c0_52 = arith.constant 0 : index
    %c0_53 = arith.constant 0 : index
    %117 = vector.load %arg8[%c0_52, %c0_53] : memref<32x8xbf16, #tpu.memory_space<vmem>>, vector<32x8xbf16>
    %cst_54 = arith.constant dense<0.000000e+00> : vector<8x8xf32>
    %118 = tpu.matmul %116, %117, %cst_54 {dimension_numbers = #tpu.dot_dimension_numbers<[1], [0], [0], [1], [0, 0, 1, 1], [], []>} : vector<8x32xbf16>, vector<32x8xbf16>, vector<8x8xf32> -> vector<8x8xf32>
    %c0_55 = arith.constant 0 : index
    %c0_56 = arith.constant 0 : index
    %119 = vector.load %arg9[%c0_55, %c0_56] : memref<1x8xf32, #tpu.memory_space<vmem>>, vector<1x8xf32>
    %120 = vector.broadcast %119 : vector<1x8xf32> to vector<8x8xf32>
    %121 = arith.addf %118, %120 : vector<8x8xf32>
    %122 = vector.shape_cast %121 : vector<8x8xf32> to vector<1x8x8xf32>
    %123 = arith.truncf %122 : vector<1x8x8xf32> to vector<1x8x8xbf16>
    %124 = vector.shape_cast %52 : vector<8x32xf32> to vector<1x8x32xf32>
    %125 = arith.truncf %124 : vector<1x8x32xf32> to vector<1x8x32xbf16>
    "tpu.trace_start"() <{level = 10 : i32, message = "bij,bjf->bif"}> : () -> ()
    %cst_57 = arith.constant dense<0.000000e+00> : vector<1x8x32xf32>
    %126 = tpu.matmul %123, %125, %cst_57 {dimension_numbers = #tpu.dot_dimension_numbers<[2], [1], [1], [2], [0, 0, 0, 1, 1, 2], [0], [0]>} : vector<1x8x8xbf16>, vector<1x8x32xbf16>, vector<1x8x32xf32> -> vector<1x8x32xf32>
    "tpu.trace_stop"() : () -> ()
    %127 = vector.shape_cast %126 : vector<1x8x32xf32> to vector<8x32xf32>
    %128 = arith.truncf %127 : vector<8x32xf32> to vector<8x32xbf16>
    %c0_58 = arith.constant 0 : index
    %c0_59 = arith.constant 0 : index
    %129 = vector.load %arg10[%c0_58, %c0_59] : memref<32x128xbf16, #tpu.memory_space<vmem>>, vector<32x128xbf16>
    %cst_60 = arith.constant dense<0.000000e+00> : vector<8x128xf32>
    %130 = tpu.matmul %128, %129, %cst_60 {dimension_numbers = #tpu.dot_dimension_numbers<[1], [0], [0], [1], [0, 0, 1, 1], [], []>} : vector<8x32xbf16>, vector<32x128xbf16>, vector<8x128xf32> -> vector<8x128xf32>
    %c0_61 = arith.constant 0 : index
    %c0_62 = arith.constant 0 : index
    %131 = vector.load %arg11[%c0_61, %c0_62] : memref<1x128xf32, #tpu.memory_space<vmem>>, vector<1x128xf32>
    %132 = vector.broadcast %131 : vector<1x128xf32> to vector<8x128xf32>
    %133 = arith.addf %130, %132 : vector<8x128xf32>
    %134 = vector.shape_cast %133 : vector<8x128xf32> to vector<1x8x128xf32>
    %c0_63 = arith.constant 0 : index
    %c0_64 = arith.constant 0 : index
    %c0_65 = arith.constant 0 : index
    %135 = vector.load %arg12[%c0_63, %c0_64, %c0_65] : memref<1x8x128xf32, #tpu.memory_space<vmem>>, vector<1x8x128xf32>
    tpu.vector_store %arg12[%c0_63, %c0_64, %c0_65], %134 {strides = array<i32>} : memref<1x8x128xf32, #tpu.memory_space<vmem>>, vector<1x8x128xf32>,
    return
  }
  func.func @transform_0(%arg0: i32) -> (i32, i32, i32) {
    %c0_i32 = arith.constant 0 : i32
    %c0_i32_0 = arith.constant 0 : i32
    %c0_i32_1 = arith.constant 0 : i32
    return %arg0, %c0_i32, %c0_i32_0 : i32, i32, i32
  }
  func.func @transform_1(%arg0: i32) -> (i32, i32) {
    %c0_i32 = arith.constant 0 : i32
    %c0_i32_0 = arith.constant 0 : i32
    %c0_i32_1 = arith.constant 0 : i32
    return %c0_i32, %c0_i32_0 : i32, i32
  }
  func.func @transform_2(%arg0: i32) -> (i32, i32) {
    %c0_i32 = arith.constant 0 : i32
    %c0_i32_0 = arith.constant 0 : i32
    %c0_i32_1 = arith.constant 0 : i32
    return %c0_i32, %c0_i32_0 : i32, i32
  }
  func.func @transform_3(%arg0: i32) -> (i32, i32) {
    %c0_i32 = arith.constant 0 : i32
    %c0_i32_0 = arith.constant 0 : i32
    %c0_i32_1 = arith.constant 0 : i32
    return %c0_i32, %c0_i32_0 : i32, i32
  }
  func.func @transform_4(%arg0: i32) -> (i32, i32) {
    %c0_i32 = arith.constant 0 : i32
    %c0_i32_0 = arith.constant 0 : i32
    %c0_i32_1 = arith.constant 0 : i32
    return %c0_i32, %c0_i32_0 : i32, i32
  }
  func.func @transform_5(%arg0: i32) -> (i32, i32) {
    %c0_i32 = arith.constant 0 : i32
    %c0_i32_0 = arith.constant 0 : i32
    %c0_i32_1 = arith.constant 0 : i32
    return %c0_i32, %c0_i32_0 : i32, i32
  }
  func.func @transform_6(%arg0: i32) -> (i32, i32) {
    %c0_i32 = arith.constant 0 : i32
    %c0_i32_0 = arith.constant 0 : i32
    %c0_i32_1 = arith.constant 0 : i32
    return %c0_i32, %c0_i32_0 : i32, i32
  }
  func.func @transform_7(%arg0: i32) -> (i32, i32) {
    %c0_i32 = arith.constant 0 : i32
    %c0_i32_0 = arith.constant 0 : i32
    %c0_i32_1 = arith.constant 0 : i32
    return %c0_i32, %c0_i32_0 : i32, i32
  }
  func.func @transform_8(%arg0: i32) -> (i32, i32) {
    %c0_i32 = arith.constant 0 : i32
    %c0_i32_0 = arith.constant 0 : i32
    %c0_i32_1 = arith.constant 0 : i32
    return %c0_i32, %c0_i32_0 : i32, i32
  }
  func.func @transform_9(%arg0: i32) -> (i32, i32) {
    %c0_i32 = arith.constant 0 : i32
    %c0_i32_0 = arith.constant 0 : i32
    %c0_i32_1 = arith.constant 0 : i32
    return %c0_i32, %c0_i32_0 : i32, i32
  }
  func.func @transform_10(%arg0: i32) -> (i32, i32) {
    %c0_i32 = arith.constant 0 : i32
    %c0_i32_0 = arith.constant 0 : i32
    %c0_i32_1 = arith.constant 0 : i32
    return %c0_i32, %c0_i32_0 : i32, i32
  }
  func.func @transform_11(%arg0: i32) -> (i32, i32, i32) {
    %c0_i32 = arith.constant 0 : i32
    %c0_i32_0 = arith.constant 0 : i32
    %c0_i32_1 = arith.constant 0 : i32
    return %arg0, %c0_i32, %c0_i32_0 : i32, i32, i32
  }
}

module attributes {stable_mosaic.version = 11 : i64} {
  func.func @_wgmlp_kernel(%arg0: i32, %arg1: memref<1x8x128xbf16, #tpu.memory_space<vmem>>, %arg2: memref<128x32xbf16, #tpu.memory_space<vmem>>, %arg3: memref<128x32xbf16, #tpu.memory_space<vmem>>, %arg4: memref<1x32xf32, #tpu.memory_space<vmem>>, %arg5: memref<1x32xf32, #tpu.memory_space<vmem>>, %arg6: memref<1x32xf32, #tpu.memory_space<vmem>>, %arg7: memref<1x32xf32, #tpu.memory_space<vmem>>, %arg8: memref<32x8xbf16, #tpu.memory_space<vmem>>, %arg9: memref<1x8xf32, #tpu.memory_space<vmem>>, %arg10: memref<32x128xbf16, #tpu.memory_space<vmem>>, %arg11: memref<1x128xf32, #tpu.memory_space<vmem>>, %arg12: memref<1x8x128xf32, #tpu.memory_space<vmem>>) attributes {dimension_semantics = [#tpu.dimension_semantics<parallel>], iteration_bounds = array<i64: 2>, scalar_prefetch = 0 : i64, scratch_operands = 0 : i64, tpu.core_type = #tpu.core_type<tc>, window_params = [{transform_indices = @transform_0, window_bounds = array<i64: 1, 8, 128>}, {pipeline_mode = #tpu.pipeline_mode<synchronous>, transform_indices = @transform_1, window_bounds = array<i64: 128, 32>}, {pipeline_mode = #tpu.pipeline_mode<synchronous>, transform_indices = @transform_2, window_bounds = array<i64: 128, 32>}, {pipeline_mode = #tpu.pipeline_mode<synchronous>, transform_indices = @transform_3, window_bounds = array<i64: 1, 32>}, {pipeline_mode = #tpu.pipeline_mode<synchronous>, transform_indices = @transform_4, window_bounds = array<i64: 1, 32>}, {pipeline_mode = #tpu.pipeline_mode<synchronous>, transform_indices = @transform_5, window_bounds = array<i64: 1, 32>}, {pipeline_mode = #tpu.pipeline_mode<synchronous>, transform_indices = @transform_6, window_bounds = array<i64: 1, 32>}, {pipeline_mode = #tpu.pipeline_mode<synchronous>, transform_indices = @transform_7, window_bounds = array<i64: 32, 8>}, {pipeline_mode = #tpu.pipeline_mode<synchronous>, transform_indices = @transform_8, window_bounds = array<i64: 1, 8>}, {pipeline_mode = #tpu.pipeline_mode<synchronous>, transform_indices = @transform_9, window_bounds = array<i64: 32, 128>}, {pipeline_mode = #tpu.pipeline_mode<synchronous>, transform_indices = @transform_10, window_bounds = array<i64: 1, 128>}, {transform_indices = @transform_11, window_bounds = array<i64: 1, 8, 128>}]} {
    %c0 = arith.constant 0 : index
    %c0_0 = arith.constant 0 : index
    %c0_1 = arith.constant 0 : index
    %0 = vector.load %arg1[%c0, %c0_0, %c0_1] : memref<1x8x128xbf16, #tpu.memory_space<vmem>>, vector<1x8x128xbf16>
    %1 = vector.shape_cast %0 : vector<1x8x128xbf16> to vector<8x128xbf16>
    %c0_2 = arith.constant 0 : index
    %c0_3 = arith.constant 0 : index
    %2 = vector.load %arg2[%c0_2, %c0_3] : memref<128x32xbf16, #tpu.memory_space<vmem>>, vector<128x32xbf16>
    %cst = arith.constant dense<0.000000e+00> : vector<8x32xf32>
    %3 = tpu.matmul %1, %2, %cst {dimension_numbers = #tpu.dot_dimension_numbers<[1], [0], [0], [1], [0, 0, 1, 1], [], []>} : vector<8x128xbf16>, vector<128x32xbf16>, vector<8x32xf32> -> vector<8x32xf32>
    %c0_4 = arith.constant 0 : index
    %c0_5 = arith.constant 0 : index
    %4 = vector.load %arg4[%c0_4, %c0_5] : memref<1x32xf32, #tpu.memory_space<vmem>>, vector<1x32xf32>
    %5 = vector.broadcast %4 : vector<1x32xf32> to vector<8x32xf32>
    %6 = arith.addf %3, %5 : vector<8x32xf32>
    %c0_6 = arith.constant 0 : index
    %c0_7 = arith.constant 0 : index
    %7 = vector.load %arg3[%c0_6, %c0_7] : memref<128x32xbf16, #tpu.memory_space<vmem>>, vector<128x32xbf16>
    %cst_8 = arith.constant dense<0.000000e+00> : vector<8x32xf32>
    %8 = tpu.matmul %1, %7, %cst_8 {dimension_numbers = #tpu.dot_dimension_numbers<[1], [0], [0], [1], [0, 0, 1, 1], [], []>} : vector<8x128xbf16>, vector<128x32xbf16>, vector<8x32xf32> -> vector<8x32xf32>
    %c0_9 = arith.constant 0 : index
    %c0_10 = arith.constant 0 : index
    %9 = vector.load %arg5[%c0_9, %c0_10] : memref<1x32xf32, #tpu.memory_space<vmem>>, vector<1x32xf32>
    %10 = vector.broadcast %9 : vector<1x32xf32> to vector<8x32xf32>
    %11 = arith.addf %8, %10 : vector<8x32xf32>
    %cst_11 = arith.constant 5.000000e-01 : f32
    %12 = vector.broadcast %cst_11 : f32 to vector<8x32xf32>
    %13 = arith.mulf %12, %6 : vector<8x32xf32>
    %cst_12 = arith.constant 0.707106769 : f32
    %14 = vector.broadcast %cst_12 : f32 to vector<8x32xf32>
    %15 = arith.mulf %6, %14 : vector<8x32xf32>
    %cst_13 = arith.constant 0.000000e+00 : f32
    %16 = vector.broadcast %cst_13 : f32 to vector<8x32xf32>
    %17 = arith.cmpf oge, %15, %16 : vector<8x32xf32>
    %cst_14 = arith.constant 1.000000e+00 : f32
    %cst_15 = arith.constant -1.000000e+00 : f32
    %18 = vector.broadcast %cst_14 : f32 to vector<8x32xf32>
    %19 = vector.broadcast %cst_15 : f32 to vector<8x32xf32>
    %20 = arith.select %17, %18, %19 : vector<8x32xi1>, vector<8x32xf32>
    %21 = math.absf %15 : vector<8x32xf32>
    %cst_16 = arith.constant 0.327591091 : f32
    %22 = vector.broadcast %cst_16 : f32 to vector<8x32xf32>
    %23 = arith.mulf %22, %21 : vector<8x32xf32>
    %cst_17 = arith.constant 1.000000e+00 : f32
    %24 = vector.broadcast %cst_17 : f32 to vector<8x32xf32>
    %25 = arith.addf %24, %23 : vector<8x32xf32>
    %cst_18 = arith.constant 1.000000e+00 : f32
    %26 = vector.broadcast %cst_18 : f32 to vector<8x32xf32>
    %27 = arith.divf %26, %25 : vector<8x32xf32>
    %cst_19 = arith.constant 1.06140542 : f32
    %28 = vector.broadcast %cst_19 : f32 to vector<8x32xf32>
    %29 = arith.mulf %27, %28 : vector<8x32xf32>
    %cst_20 = arith.constant -1.45315206 : f32
    %30 = vector.broadcast %cst_20 : f32 to vector<8x32xf32>
    %31 = arith.addf %30, %29 : vector<8x32xf32>
    %32 = arith.mulf %27, %31 : vector<8x32xf32>
    %cst_21 = arith.constant 1.42141378 : f32
    %33 = vector.broadcast %cst_21 : f32 to vector<8x32xf32>
    %34 = arith.addf %33, %32 : vector<8x32xf32>
    %35 = arith.mulf %27, %34 : vector<8x32xf32>
    %cst_22 = arith.constant -0.284496725 : f32
    %36 = vector.broadcast %cst_22 : f32 to vector<8x32xf32>
    %37 = arith.addf %36, %35 : vector<8x32xf32>
    %38 = arith.mulf %27, %37 : vector<8x32xf32>
    %cst_23 = arith.constant 0.254829586 : f32
    %39 = vector.broadcast %cst_23 : f32 to vector<8x32xf32>
    %40 = arith.addf %39, %38 : vector<8x32xf32>
    %41 = arith.mulf %27, %40 : vector<8x32xf32>
    %cst_24 = arith.constant 0.000000e+00 : f32
    %42 = vector.broadcast %cst_24 : f32 to vector<8x32xf32>
    %43 = arith.subf %42, %21 : vector<8x32xf32>
    %44 = arith.mulf %43, %21 : vector<8x32xf32>
    %45 = math.exp %44 : vector<8x32xf32>
    %46 = arith.mulf %41, %45 : vector<8x32xf32>
    %cst_25 = arith.constant 1.000000e+00 : f32
    %47 = vector.broadcast %cst_25 : f32 to vector<8x32xf32>
    %48 = arith.subf %47, %46 : vector<8x32xf32>
    %49 = arith.mulf %20, %48 : vector<8x32xf32>
    %cst_26 = arith.constant 1.000000e+00 : f32
    %50 = vector.broadcast %cst_26 : f32 to vector<8x32xf32>
    %51 = arith.addf %50, %49 : vector<8x32xf32>
    %52 = arith.mulf %13, %51 : vector<8x32xf32>
    %cst_27 = arith.constant 5.000000e-01 : f32
    %53 = vector.broadcast %cst_27 : f32 to vector<8x32xf32>
    %54 = arith.mulf %53, %11 : vector<8x32xf32>
    %cst_28 = arith.constant 0.707106769 : f32
    %55 = vector.broadcast %cst_28 : f32 to vector<8x32xf32>
    %56 = arith.mulf %11, %55 : vector<8x32xf32>
    %cst_29 = arith.constant 0.000000e+00 : f32
    %57 = vector.broadcast %cst_29 : f32 to vector<8x32xf32>
    %58 = arith.cmpf oge, %56, %57 : vector<8x32xf32>
    %cst_30 = arith.constant 1.000000e+00 : f32
    %cst_31 = arith.constant -1.000000e+00 : f32
    %59 = vector.broadcast %cst_30 : f32 to vector<8x32xf32>
    %60 = vector.broadcast %cst_31 : f32 to vector<8x32xf32>
    %61 = arith.select %58, %59, %60 : vector<8x32xi1>, vector<8x32xf32>
    %62 = math.absf %56 : vector<8x32xf32>
    %cst_32 = arith.constant 0.327591091 : f32
    %63 = vector.broadcast %cst_32 : f32 to vector<8x32xf32>
    %64 = arith.mulf %63, %62 : vector<8x32xf32>
    %cst_33 = arith.constant 1.000000e+00 : f32
    %65 = vector.broadcast %cst_33 : f32 to vector<8x32xf32>
    %66 = arith.addf %65, %64 : vector<8x32xf32>
    %cst_34 = arith.constant 1.000000e+00 : f32
    %67 = vector.broadcast %cst_34 : f32 to vector<8x32xf32>
    %68 = arith.divf %67, %66 : vector<8x32xf32>
    %cst_35 = arith.constant 1.06140542 : f32
    %69 = vector.broadcast %cst_35 : f32 to vector<8x32xf32>
    %70 = arith.mulf %68, %69 : vector<8x32xf32>
    %cst_36 = arith.constant -1.45315206 : f32
    %71 = vector.broadcast %cst_36 : f32 to vector<8x32xf32>
    %72 = arith.addf %71, %70 : vector<8x32xf32>
    %73 = arith.mulf %68, %72 : vector<8x32xf32>
    %cst_37 = arith.constant 1.42141378 : f32
    %74 = vector.broadcast %cst_37 : f32 to vector<8x32xf32>
    %75 = arith.addf %74, %73 : vector<8x32xf32>
    %76 = arith.mulf %68, %75 : vector<8x32xf32>
    %cst_38 = arith.constant -0.284496725 : f32
    %77 = vector.broadcast %cst_38 : f32 to vector<8x32xf32>
    %78 = arith.addf %77, %76 : vector<8x32xf32>
    %79 = arith.mulf %68, %78 : vector<8x32xf32>
    %cst_39 = arith.constant 0.254829586 : f32
    %80 = vector.broadcast %cst_39 : f32 to vector<8x32xf32>
    %81 = arith.addf %80, %79 : vector<8x32xf32>
    %82 = arith.mulf %68, %81 : vector<8x32xf32>
    %cst_40 = arith.constant 0.000000e+00 : f32
    %83 = vector.broadcast %cst_40 : f32 to vector<8x32xf32>
    %84 = arith.subf %83, %62 : vector<8x32xf32>
    %85 = arith.mulf %84, %62 : vector<8x32xf32>
    %86 = math.exp %85 : vector<8x32xf32>
    %87 = arith.mulf %82, %86 : vector<8x32xf32>
    %cst_41 = arith.constant 1.000000e+00 : f32
    %88 = vector.broadcast %cst_41 : f32 to vector<8x32xf32>
    %89 = arith.subf %88, %87 : vector<8x32xf32>
    %90 = arith.mulf %61, %89 : vector<8x32xf32>
    %cst_42 = arith.constant 1.000000e+00 : f32
    %91 = vector.broadcast %cst_42 : f32 to vector<8x32xf32>
    %92 = arith.addf %91, %90 : vector<8x32xf32>
    %93 = arith.mulf %54, %92 : vector<8x32xf32>
    %cst_43 = arith.constant dense<0.000000e+00> : vector<8xf32>
    %94 = vector.multi_reduction <add>, %93, %cst_43 [1] : vector<8x32xf32> to vector<8xf32>
    %95 = vector.shape_cast %94 : vector<8xf32> to vector<8x1xf32>
    %cst_44 = arith.constant 3.125000e-02 : f32
    %96 = vector.broadcast %cst_44 : f32 to vector<8x1xf32>
    %97 = arith.mulf %95, %96 : vector<8x1xf32>
    %98 = vector.broadcast %97 : vector<8x1xf32> to vector<8x32xf32>
    %99 = arith.subf %93, %98 : vector<8x32xf32>
    %100 = arith.mulf %99, %99 : vector<8x32xf32>
    %cst_45 = arith.constant dense<0.000000e+00> : vector<8xf32>
    %101 = vector.multi_reduction <add>, %100, %cst_45 [1] : vector<8x32xf32> to vector<8xf32>
    %102 = vector.shape_cast %101 : vector<8xf32> to vector<8x1xf32>
    %cst_46 = arith.constant 3.125000e-02 : f32
    %103 = vector.broadcast %cst_46 : f32 to vector<8x1xf32>
    %104 = arith.mulf %102, %103 : vector<8x1xf32>
    %cst_47 = arith.constant 9.99999974E-6 : f32
    %105 = vector.broadcast %cst_47 : f32 to vector<8x1xf32>
    %106 = arith.addf %104, %105 : vector<8x1xf32>
    %107 = math.rsqrt %106 : vector<8x1xf32>
    %108 = vector.broadcast %107 : vector<8x1xf32> to vector<8x32xf32>
    %109 = arith.mulf %99, %108 : vector<8x32xf32>
    %c0_48 = arith.constant 0 : index
    %c0_49 = arith.constant 0 : index
    %110 = vector.load %arg6[%c0_48, %c0_49] : memref<1x32xf32, #tpu.memory_space<vmem>>, vector<1x32xf32>
    %111 = vector.broadcast %110 : vector<1x32xf32> to vector<8x32xf32>
    %112 = arith.mulf %109, %111 : vector<8x32xf32>
    %c0_50 = arith.constant 0 : index
    %c0_51 = arith.constant 0 : index
    %113 = vector.load %arg7[%c0_50, %c0_51] : memref<1x32xf32, #tpu.memory_space<vmem>>, vector<1x32xf32>
    %114 = vector.broadcast %113 : vector<1x32xf32> to vector<8x32xf32>
    %115 = arith.addf %112, %114 : vector<8x32xf32>
    %116 = arith.truncf %115 : vector<8x32xf32> to vector<8x32xbf16>
    %c0_52 = arith.constant 0 : index
    %c0_53 = arith.constant 0 : index
    %117 = vector.load %arg8[%c0_52, %c0_53] : memref<32x8xbf16, #tpu.memory_space<vmem>>, vector<32x8xbf16>
    %cst_54 = arith.constant dense<0.000000e+00> : vector<8x8xf32>
    %118 = tpu.matmul %116, %117, %cst_54 {dimension_numbers = #tpu.dot_dimension_numbers<[1], [0], [0], [1], [0, 0, 1, 1], [], []>} : vector<8x32xbf16>, vector<32x8xbf16>, vector<8x8xf32> -> vector<8x8xf32>
    %c0_55 = arith.constant 0 : index
    %c0_56 = arith.constant 0 : index
    %119 = vector.load %arg9[%c0_55, %c0_56] : memref<1x8xf32, #tpu.memory_space<vmem>>, vector<1x8xf32>
    %120 = vector.broadcast %119 : vector<1x8xf32> to vector<8x8xf32>
    %121 = arith.addf %118, %120 : vector<8x8xf32>
    %122 = vector.shape_cast %121 : vector<8x8xf32> to vector<1x8x8xf32>
    %123 = arith.truncf %122 : vector<1x8x8xf32> to vector<1x8x8xbf16>
    %124 = vector.shape_cast %52 : vector<8x32xf32> to vector<1x8x32xf32>
    %125 = arith.truncf %124 : vector<1x8x32xf32> to vector<1x8x32xbf16>
    "tpu.trace_start"() <{level = 10 : i32, message = "bij,bjf->bif"}> : () -> ()
    %cst_57 = arith.constant dense<0.000000e+00> : vector<1x8x32xf32>
    %126 = tpu.matmul %123, %125, %cst_57 {dimension_numbers = #tpu.dot_dimension_numbers<[2], [1], [1], [2], [0, 0, 0, 1, 1, 2], [0], [0]>} : vector<1x8x8xbf16>, vector<1x8x32xbf16>, vector<1x8x32xf32> -> vector<1x8x32xf32>
    "tpu.trace_stop"() : () -> ()
    %127 = vector.shape_cast %126 : vector<1x8x32xf32> to vector<8x32xf32>
    %128 = arith.truncf %127 : vector<8x32xf32> to vector<8x32xbf16>
    %c0_58 = arith.constant 0 : index
    %c0_59 = arith.constant 0 : index
    %129 = vector.load %arg10[%c0_58, %c0_59] : memref<32x128xbf16, #tpu.memory_space<vmem>>, vector<32x128xbf16>
    %cst_60 = arith.constant dense<0.000000e+00> : vector<8x128xf32>
    %130 = tpu.matmul %128, %129, %cst_60 {dimension_numbers = #tpu.dot_dimension_numbers<[1], [0], [0], [1], [0, 0, 1, 1], [], []>} : vector<8x32xbf16>, vector<32x128xbf16>, vector<8x128xf32> -> vector<8x128xf32>
    %c0_61 = arith.constant 0 : index
    %c0_62 = arith.constant 0 : index
    %131 = vector.load %arg11[%c0_61, %c0_62] : memref<1x128xf32, #tpu.memory_space<vmem>>, vector<1x128xf32>
    %132 = vector.broadcast %131 : vector<1x128xf32> to vector<8x128xf32>
    %133 = arith.addf %130, %132 : vector<8x128xf32>
    %134 = vector.shape_cast %133 : vector<8x128xf32> to vector<1x8x128xf32>
    %c0_63 = arith.constant 0 : index
    %c0_64 = arith.constant 0 : index
    %c0_65 = arith.constant 0 : index
    %135 = vector.load %arg12[%c0_63, %c0_64, %c0_65] : memref<1x8x128xf32, #tpu.memory_space<vmem>>, vector<1x8x128xf32>
    tpu.vector_store %arg12[%c0_63, %c0_64, %c0_65], %134 {strides = array<i32>} : memref<1x8x128xf32, #tpu.memory_space<vmem>>, vector<1x8x128xf32>,
    return
  }
  func.func @transform_0(%arg0: i32) -> (i32, i32, i32) {
    %c0_i32 = arith.constant 0 : i32
    %c0_i32_0 = arith.constant 0 : i32
    %c0_i32_1 = arith.constant 0 : i32
    return %arg0, %c0_i32, %c0_i32_0 : i32, i32, i32
  }
  func.func @transform_1(%arg0: i32) -> (i32, i32) {
    %c0_i32 = arith.constant 0 : i32
    %c0_i32_0 = arith.constant 0 : i32
    %c0_i32_1 = arith.constant 0 : i32
    return %c0_i32, %c0_i32_0 : i32, i32
  }
  func.func @transform_2(%arg0: i32) -> (i32, i32) {
    %c0_i32 = arith.constant 0 : i32
    %c0_i32_0 = arith.constant 0 : i32
    %c0_i32_1 = arith.constant 0 : i32
    return %c0_i32, %c0_i32_0 : i32, i32
  }
  func.func @transform_3(%arg0: i32) -> (i32, i32) {
    %c0_i32 = arith.constant 0 : i32
    %c0_i32_0 = arith.constant 0 : i32
    %c0_i32_1 = arith.constant 0 : i32
    return %c0_i32, %c0_i32_0 : i32, i32
  }
  func.func @transform_4(%arg0: i32) -> (i32, i32) {
    %c0_i32 = arith.constant 0 : i32
    %c0_i32_0 = arith.constant 0 : i32
    %c0_i32_1 = arith.constant 0 : i32
    return %c0_i32, %c0_i32_0 : i32, i32
  }
  func.func @transform_5(%arg0: i32) -> (i32, i32) {
    %c0_i32 = arith.constant 0 : i32
    %c0_i32_0 = arith.constant 0 : i32
    %c0_i32_1 = arith.constant 0 : i32
    return %c0_i32, %c0_i32_0 : i32, i32
  }
  func.func @transform_6(%arg0: i32) -> (i32, i32) {
    %c0_i32 = arith.constant 0 : i32
    %c0_i32_0 = arith.constant 0 : i32
    %c0_i32_1 = arith.constant 0 : i32
    return %c0_i32, %c0_i32_0 : i32, i32
  }
  func.func @transform_7(%arg0: i32) -> (i32, i32) {
    %c0_i32 = arith.constant 0 : i32
    %c0_i32_0 = arith.constant 0 : i32
    %c0_i32_1 = arith.constant 0 : i32
    return %c0_i32, %c0_i32_0 : i32, i32
  }
  func.func @transform_8(%arg0: i32) -> (i32, i32) {
    %c0_i32 = arith.constant 0 : i32
    %c0_i32_0 = arith.constant 0 : i32
    %c0_i32_1 = arith.constant 0 : i32
    return %c0_i32, %c0_i32_0 : i32, i32
  }
  func.func @transform_9(%arg0: i32) -> (i32, i32) {
    %c0_i32 = arith.constant 0 : i32
    %c0_i32_0 = arith.constant 0 : i32
    %c0_i32_1 = arith.constant 0 : i32
    return %c0_i32, %c0_i32_0 : i32, i32
  }
  func.func @transform_10(%arg0: i32) -> (i32, i32) {
    %c0_i32 = arith.constant 0 : i32
    %c0_i32_0 = arith.constant 0 : i32
    %c0_i32_1 = arith.constant 0 : i32
    return %c0_i32, %c0_i32_0 : i32, i32
  }
  func.func @transform_11(%arg0: i32) -> (i32, i32, i32) {
    %c0_i32 = arith.constant 0 : i32
    %c0_i32_0 = arith.constant 0 : i32
    %c0_i32_1 = arith.constant 0 : i32
    return %arg0, %c0_i32, %c0_i32_0 : i32, i32, i32
  }
}

</mosaic_0001>

<llo_original>
// kernel: tpu_custom_call.1
$region0: #{tpu_custom_call.1}
  #allocation0 [shape = 'u32[]', space=smem, size = 0x4, offset = 0x4, fixed_abs, tag = 'smem constant byte address 0x4 - core index']
  #allocation1 [shape = 'u32[144,128]{1,0:T(1,128)}', space=vmem, size = 0x12000, scoped, tag = 'internal scratch']
  %s0 = inlined_call_operand.hbm [shape: bf16[2,8,128], index: 0, kind: input, shape index: {}]
  %s1 = inlined_call_operand.hbm [shape: bf16[128,32], index: 1, kind: input, shape index: {}]
  %s2 = inlined_call_operand.hbm [shape: bf16[128,32], index: 2, kind: input, shape index: {}]
  %s3 = inlined_call_operand.hbm [shape: f32[1,32], index: 3, kind: input, shape index: {}]
  %s4 = inlined_call_operand.hbm [shape: f32[1,32], index: 4, kind: input, shape index: {}]
  %s5 = inlined_call_operand.hbm [shape: f32[1,32], index: 5, kind: input, shape index: {}]
  %s6 = inlined_call_operand.hbm [shape: f32[1,32], index: 6, kind: input, shape index: {}]
  %s7 = inlined_call_operand.hbm [shape: bf16[32,8], index: 7, kind: input, shape index: {}]
  %s8 = inlined_call_operand.hbm [shape: f32[1,8], index: 8, kind: input, shape index: {}]
  %s9 = inlined_call_operand.hbm [shape: bf16[32,128], index: 9, kind: input, shape index: {}]
  %s10 = inlined_call_operand.hbm [shape: f32[1,128], index: 10, kind: input, shape index: {}]
  %s11 = inlined_call_operand.hbm [shape: f32[2,8,128], index: 11, kind: output, shape index: {}]
  %s12 = sld [smem:[#allocation0]]
  $region121: #{tpu_custom_call.1} parent=0
    _
  %s14 = ssub.s32 1, %s12
  %s15 = scalar_select 0, %s14, %s12
  $region1: #{tpu_custom_call.1} parent=0
    #allocation2 [shape = 'u8[4096]{0}', space=vmem, size = 0x1000, scoped, tag = 'input window, operand 0']
    #allocation3 [shape = 's32[2]{0}', space=sflag, size = 0x8, scoped, tag = 'scoped memory for tpu_custom_call.1']
    #allocation4 [shape = 's32[2]{0}', space=sflag, size = 0x8, scoped, tag = 'scoped memory for tpu_custom_call.1']
    #allocation5 [shape = 'u8[32768]{0}', space=vmem, size = 0x8000, scoped, tag = 'input window, operand 1, single buffered']
    #allocation6 [shape = 's32[1]{0}', space=sflag, size = 0x4, scoped, tag = 'scoped memory for tpu_custom_call.1']
    #allocation7 [shape = 'u8[32768]{0}', space=vmem, size = 0x8000, scoped, tag = 'input window, operand 2, single buffered']
    #allocation8 [shape = 'u8[512]{0}', space=vmem, size = 0x400, scoped, tag = 'input window, operand 3, single buffered']
    #allocation9 [shape = 's32[1]{0}', space=sflag, size = 0x4, scoped, tag = 'scoped memory for tpu_custom_call.1']
    #allocation10 [shape = 'u8[512]{0}', space=vmem, size = 0x400, scoped, tag = 'input window, operand 4, single buffered']
    #allocation11 [shape = 'u8[512]{0}', space=vmem, size = 0x400, scoped, tag = 'input window, operand 5, single buffered']
    #allocation12 [shape = 's32[1]{0}', space=sflag, size = 0x4, scoped, tag = 'scoped memory for tpu_custom_call.1']
    #allocation13 [shape = 'u8[512]{0}', space=vmem, size = 0x400, scoped, tag = 'input window, operand 6, single buffered']
    #allocation14 [shape = 'u8[8192]{0}', space=vmem, size = 0x2000, scoped, tag = 'input window, operand 7, single buffered']
    #allocation15 [shape = 's32[1]{0}', space=sflag, size = 0x4, scoped, tag = 'scoped memory for tpu_custom_call.1']
    #allocation16 [shape = 'u8[512]{0}', space=vmem, size = 0x400, scoped, tag = 'input window, operand 8, single buffered']
    #allocation17 [shape = 'u8[8192]{0}', space=vmem, size = 0x2000, scoped, tag = 'input window, operand 9, single buffered']
    #allocation18 [shape = 's32[1]{0}', space=sflag, size = 0x4, scoped, tag = 'scoped memory for tpu_custom_call.1']
    #allocation19 [shape = 'u8[512]{0}', space=vmem, size = 0x400, scoped, tag = 'input window, operand 10, single buffered']
    #allocation20 [shape = 'u8[8192]{0}', space=vmem, size = 0x2000, scoped, tag = 'output window, operand 0']
    %16 = vsyncpa [#allocation3], 0
    %s17 = scalar_lea.sflag [#allocation3], 1
    %18 = vsyncpa %s17, 0
    %19 = vsyncpa [#allocation6], 0
    %20 = vsyncpa [#allocation9], 0
    %21 = vsyncpa [#allocation12], 0
    %22 = vsyncpa [#allocation15], 0
    %23 = vsyncpa [#allocation18], 0
    %24 = vsyncpa [#allocation4], 0
    %s25 = scalar_lea.sflag [#allocation4], 1
    %26 = vsyncpa %s25, 0
    loop: start=0, step=1, limit=4
    $region2: #{tpu_custom_call.1} parent=1 // loop_pre_header
      _
    $region3: #{tpu_custom_call.1} parent=1 // loop_header
      %s28 = sphi 0, %s32
      %p29 = scmp.ge.s32.totalorder %s28, 4
      %s38 = sphi 0, %s40
      %s41 = sphi 0, %s38
      %s42 = sphi 0, %s41
      %s58 = sphi 0, %s42
      %s62 = sphi 0, %s62
      %s64 = sphi 0, %s62
      %s65 = sphi 0, %s64
      %s79 = sphi 0, %s65
      %s83 = sphi 0, %s83
      %s85 = sphi 0, %s83
      %s86 = sphi 0, %s85
      %s100 = sphi 0, %s86
      %s104 = sphi 0, %s104
      %s106 = sphi 0, %s104
      %s107 = sphi 0, %s106
      %s121 = sphi 0, %s107
      %s125 = sphi 0, %s125
      %s127 = sphi 0, %s125
      %s128 = sphi 0, %s127
      %s142 = sphi 0, %s128
      %s146 = sphi 0, %s146
      %s148 = sphi 0, %s146
      %s149 = sphi 0, %s148
      %s163 = sphi 0, %s149
      %s167 = sphi 0, %s167
      %s169 = sphi 0, %s167
      %s170 = sphi 0, %s169
      %s184 = sphi 0, %s170
      %s188 = sphi 0, %s188
      %s190 = sphi 0, %s188
      %s191 = sphi 0, %s190
      %s205 = sphi 0, %s191
      %s209 = sphi 0, %s209
      %s211 = sphi 0, %s209
      %s212 = sphi 0, %s211
      %s226 = sphi 0, %s212
      %s230 = sphi 0, %s230
      %s232 = sphi 0, %s230
      %s233 = sphi 0, %s232
      %s247 = sphi 0, %s233
      %s251 = sphi 0, %s251
      %s253 = sphi 0, %s251
      %s254 = sphi 0, %s253
      %s268 = sphi 0, %s254
      %s274 = sphi 0, %s276
      %s277 = sphi 0, %s274
      %s278 = sphi 0, %s277
      %s294 = sphi 0, %s278
    $region4: #{tpu_custom_call.1} parent=1 // loop_header_branch
      %31 = sbr.rel (%p29) target = $region8
    $region5: #{tpu_custom_call.1} parent=1 // loop_body
      %s33 = ssub.s32 %s28, 1
      %s34 = ssub.s32 %s28, 2
      %s35 = sadd.s32 %s28, 1
      %s36 = ssub.s32 %s28, %s35
      %p37 = scmp.eq.s32.totalorder %s36, 0
      %s39 = sadd.s32 %s38, 1
      %s40 = scalar_select %p37, %s38, %s39
      %p43 = pneg %p37
      %p44 = scmp.eq.s32.totalorder %s28, 1
      %p45 = por %p43, %p44
      %p46 = scmp.ne.s32.totalorder %s38, %s41
      %p47 = scmp.eq.s32.totalorder %s28, 0
      %p48 = por %p46, %p47
      %p49 = scmp.ne.s32.totalorder %s38, %s41
      %p50 = scmp.eq.s32.totalorder %s33, 1
      %p51 = por %p49, %p50
      %p52 = scmp.ne.s32.totalorder %s41, %s42
      %p53 = scmp.eq.s32.totalorder %s33, 0
      %p54 = por %p52, %p53
      %p55 = scmp.ne.s32.totalorder %s41, %s42
      %p56 = scmp.eq.s32.totalorder %s34, 1
      %p57 = por %p55, %p56
      %p59 = scmp.ne.s32.totalorder %s42, %s58
      %p60 = scmp.eq.s32.totalorder %s34, 0
      %p61 = por %p59, %p60
      %s63 = sadd.s32 %s62, 1
      %p66 = scmp.eq.s32.totalorder %s28, 1
      %p67 = scmp.ne.s32.totalorder %s62, %s64
      %p68 = scmp.eq.s32.totalorder %s28, 0
      %p69 = por %p67, %p68
      %p70 = scmp.ne.s32.totalorder %s62, %s64
      %p71 = scmp.eq.s32.totalorder %s33, 1
      %p72 = por %p70, %p71
      %p73 = scmp.ne.s32.totalorder %s64, %s65
      %p74 = scmp.eq.s32.totalorder %s33, 0
      %p75 = por %p73, %p74
      %p76 = scmp.ne.s32.totalorder %s64, %s65
      %p77 = scmp.eq.s32.totalorder %s34, 1
      %p78 = por %p76, %p77
      %p80 = scmp.ne.s32.totalorder %s65, %s79
      %p81 = scmp.eq.s32.totalorder %s34, 0
      %p82 = por %p80, %p81
      %s84 = sadd.s32 %s83, 1
      %p87 = scmp.eq.s32.totalorder %s28, 1
      %p88 = scmp.ne.s32.totalorder %s83, %s85
      %p89 = scmp.eq.s32.totalorder %s28, 0
      %p90 = por %p88, %p89
      %p91 = scmp.ne.s32.totalorder %s83, %s85
      %p92 = scmp.eq.s32.totalorder %s33, 1
      %p93 = por %p91, %p92
      %p94 = scmp.ne.s32.totalorder %s85, %s86
      %p95 = scmp.eq.s32.totalorder %s33, 0
      %p96 = por %p94, %p95
      %p97 = scmp.ne.s32.totalorder %s85, %s86
      %p98 = scmp.eq.s32.totalorder %s34, 1
      %p99 = por %p97, %p98
      %p101 = scmp.ne.s32.totalorder %s86, %s100
      %p102 = scmp.eq.s32.totalorder %s34, 0
      %p103 = por %p101, %p102
      %s105 = sadd.s32 %s104, 1
      %p108 = scmp.eq.s32.totalorder %s28, 1
      %p109 = scmp.ne.s32.totalorder %s104, %s106
      %p110 = scmp.eq.s32.totalorder %s28, 0
      %p111 = por %p109, %p110
      %p112 = scmp.ne.s32.totalorder %s104, %s106
      %p113 = scmp.eq.s32.totalorder %s33, 1
      %p114 = por %p112, %p113
      %p115 = scmp.ne.s32.totalorder %s106, %s107
      %p116 = scmp.eq.s32.totalorder %s33, 0
      %p117 = por %p115, %p116
      %p118 = scmp.ne.s32.totalorder %s106, %s107
      %p119 = scmp.eq.s32.totalorder %s34, 1
      %p120 = por %p118, %p119
      %p122 = scmp.ne.s32.totalorder %s107, %s121
      %p123 = scmp.eq.s32.totalorder %s34, 0
      %p124 = por %p122, %p123
      %s126 = sadd.s32 %s125, 1
      %p129 = scmp.eq.s32.totalorder %s28, 1
      %p130 = scmp.ne.s32.totalorder %s125, %s127
      %p131 = scmp.eq.s32.totalorder %s28, 0
      %p132 = por %p130, %p131
      %p133 = scmp.ne.s32.totalorder %s125, %s127
      %p134 = scmp.eq.s32.totalorder %s33, 1
      %p135 = por %p133, %p134
      %p136 = scmp.ne.s32.totalorder %s127, %s128
      %p137 = scmp.eq.s32.totalorder %s33, 0
      %p138 = por %p136, %p137
      %p139 = scmp.ne.s32.totalorder %s127, %s128
      %p140 = scmp.eq.s32.totalorder %s34, 1
      %p141 = por %p139, %p140
      %p143 = scmp.ne.s32.totalorder %s128, %s142
      %p144 = scmp.eq.s32.totalorder %s34, 0
      %p145 = por %p143, %p144
      %s147 = sadd.s32 %s146, 1
      %p150 = scmp.eq.s32.totalorder %s28, 1
      %p151 = scmp.ne.s32.totalorder %s146, %s148
      %p152 = scmp.eq.s32.totalorder %s28, 0
      %p153 = por %p151, %p152
      %p154 = scmp.ne.s32.totalorder %s146, %s148
      %p155 = scmp.eq.s32.totalorder %s33, 1
      %p156 = por %p154, %p155
      %p157 = scmp.ne.s32.totalorder %s148, %s149
      %p158 = scmp.eq.s32.totalorder %s33, 0
      %p159 = por %p157, %p158
      %p160 = scmp.ne.s32.totalorder %s148, %s149
      %p161 = scmp.eq.s32.totalorder %s34, 1
      %p162 = por %p160, %p161
      %p164 = scmp.ne.s32.totalorder %s149, %s163
      %p165 = scmp.eq.s32.totalorder %s34, 0
      %p166 = por %p164, %p165
      %s168 = sadd.s32 %s167, 1
      %p171 = scmp.eq.s32.totalorder %s28, 1
      %p172 = scmp.ne.s32.totalorder %s167, %s169
      %p173 = scmp.eq.s32.totalorder %s28, 0
      %p174 = por %p172, %p173
      %p175 = scmp.ne.s32.totalorder %s167, %s169
      %p176 = scmp.eq.s32.totalorder %s33, 1
      %p177 = por %p175, %p176
      %p178 = scmp.ne.s32.totalorder %s169, %s170
      %p179 = scmp.eq.s32.totalorder %s33, 0
      %p180 = por %p178, %p179
      %p181 = scmp.ne.s32.totalorder %s169, %s170
      %p182 = scmp.eq.s32.totalorder %s34, 1
      %p183 = por %p181, %p182
      %p185 = scmp.ne.s32.totalorder %s170, %s184
      %p186 = scmp.eq.s32.totalorder %s34, 0
      %p187 = por %p185, %p186
      %s189 = sadd.s32 %s188, 1
      %p192 = scmp.eq.s32.totalorder %s28, 1
      %p193 = scmp.ne.s32.totalorder %s188, %s190
      %p194 = scmp.eq.s32.totalorder %s28, 0
      %p195 = por %p193, %p194
      %p196 = scmp.ne.s32.totalorder %s188, %s190
      %p197 = scmp.eq.s32.totalorder %s33, 1
      %p198 = por %p196, %p197
      %p199 = scmp.ne.s32.totalorder %s190, %s191
      %p200 = scmp.eq.s32.totalorder %s33, 0
      %p201 = por %p199, %p200
      %p202 = scmp.ne.s32.totalorder %s190, %s191
      %p203 = scmp.eq.s32.totalorder %s34, 1
      %p204 = por %p202, %p203
      %p206 = scmp.ne.s32.totalorder %s191, %s205
      %p207 = scmp.eq.s32.totalorder %s34, 0
      %p208 = por %p206, %p207
      %s210 = sadd.s32 %s209, 1
      %p213 = scmp.eq.s32.totalorder %s28, 1
      %p214 = scmp.ne.s32.totalorder %s209, %s211
      %p215 = scmp.eq.s32.totalorder %s28, 0
      %p216 = por %p214, %p215
      %p217 = scmp.ne.s32.totalorder %s209, %s211
      %p218 = scmp.eq.s32.totalorder %s33, 1
      %p219 = por %p217, %p218
      %p220 = scmp.ne.s32.totalorder %s211, %s212
      %p221 = scmp.eq.s32.totalorder %s33, 0
      %p222 = por %p220, %p221
      %p223 = scmp.ne.s32.totalorder %s211, %s212
      %p224 = scmp.eq.s32.totalorder %s34, 1
      %p225 = por %p223, %p224
      %p227 = scmp.ne.s32.totalorder %s212, %s226
      %p228 = scmp.eq.s32.totalorder %s34, 0
      %p229 = por %p227, %p228
      %s231 = sadd.s32 %s230, 1
      %p234 = scmp.eq.s32.totalorder %s28, 1
      %p235 = scmp.ne.s32.totalorder %s230, %s232
      %p236 = scmp.eq.s32.totalorder %s28, 0
      %p237 = por %p235, %p236
      %p238 = scmp.ne.s32.totalorder %s230, %s232
      %p239 = scmp.eq.s32.totalorder %s33, 1
      %p240 = por %p238, %p239
      %p241 = scmp.ne.s32.totalorder %s232, %s233
      %p242 = scmp.eq.s32.totalorder %s33, 0
      %p243 = por %p241, %p242
      %p244 = scmp.ne.s32.totalorder %s232, %s233
      %p245 = scmp.eq.s32.totalorder %s34, 1
      %p246 = por %p244, %p245
      %p248 = scmp.ne.s32.totalorder %s233, %s247
      %p249 = scmp.eq.s32.totalorder %s34, 0
      %p250 = por %p248, %p249
      %s252 = sadd.s32 %s251, 1
      %p255 = scmp.eq.s32.totalorder %s28, 1
      %p256 = scmp.ne.s32.totalorder %s251, %s253
      %p257 = scmp.eq.s32.totalorder %s28, 0
      %p258 = por %p256, %p257
      %p259 = scmp.ne.s32.totalorder %s251, %s253
      %p260 = scmp.eq.s32.totalorder %s33, 1
      %p261 = por %p259, %p260
      %p262 = scmp.ne.s32.totalorder %s253, %s254
      %p263 = scmp.eq.s32.totalorder %s33, 0
      %p264 = por %p262, %p263
      %p265 = scmp.ne.s32.totalorder %s253, %s254
      %p266 = scmp.eq.s32.totalorder %s34, 1
      %p267 = por %p265, %p266
      %p269 = scmp.ne.s32.totalorder %s254, %s268
      %p270 = scmp.eq.s32.totalorder %s34, 0
      %p271 = por %p269, %p270
      %s272 = ssub.s32 %s28, %s35
      %p273 = scmp.eq.s32.totalorder %s272, 0
      %s275 = sadd.s32 %s274, 1
      %s276 = scalar_select %p273, %s274, %s275
      %p279 = pneg %p273
      %p280 = scmp.eq.s32.totalorder %s28, 1
      %p281 = por %p279, %p280
      %p282 = scmp.ne.s32.totalorder %s274, %s277
      %p283 = scmp.eq.s32.totalorder %s28, 0
      %p284 = por %p282, %p283
      %p285 = scmp.ne.s32.totalorder %s274, %s277
      %p286 = scmp.eq.s32.totalorder %s33, 1
      %p287 = por %p285, %p286
      %p288 = scmp.ne.s32.totalorder %s277, %s278
      %p289 = scmp.eq.s32.totalorder %s33, 0
      %p290 = por %p288, %p289
      %p291 = scmp.ne.s32.totalorder %s277, %s278
      %p292 = scmp.eq.s32.totalorder %s34, 1
      %p293 = por %p291, %p292
      %p295 = scmp.ne.s32.totalorder %s278, %s294
      %p296 = scmp.eq.s32.totalorder %s34, 0
      %p297 = por %p295, %p296
      %p298 = scmp.le.s32.totalorder 1, %s28
      %p299 = scmp.lt.s32.totalorder %s28, 3
      %p300 = pnand %p298, %p299
      %p301 = pneg %p300
      // Predicated region
      $region9: #{tpu_custom_call.1} parent=5 // pred_check
        _
      $region10: #{tpu_custom_call.1} parent=5 // pred_check_branch
        %303 = sbr.rel (%p300) target = $region12
      $region11: #{tpu_custom_call.1} parent=5 // pred_region
        %s304 = ssub.s32 %s28, 1
        // Predicated region
        $region13: #{tpu_custom_call.1} parent=11 // pred_check
          %p305 = pneg %p75
        $region14: #{tpu_custom_call.1} parent=11 // pred_check_branch
          %307 = sbr.rel (%p305) target = $region16
        $region15: #{tpu_custom_call.1} parent=11 // pred_region
          %s309 = ssub.s32 1024, 1024
          %310 = vsyncadd [#allocation6], %s309
          %s311 = sshll.u32 [#allocation5], 4
          %s312 = int_to_ptr.vmem [resolvable:$true] %s311
          %317 = dma.hbm_to_vmem [thread:$0]  %s1, 1024, %s312, [#allocation6], 64, 64, 4
        $region16: #{tpu_custom_call.1} parent=11 // pred_fallthru
          _
        // Predicated region
        $region17: #{tpu_custom_call.1} parent=11 // pred_check
          %p318 = pneg %p96
        $region18: #{tpu_custom_call.1} parent=11 // pred_check_branch
          %320 = sbr.rel (%p318) target = $region20
        $region19: #{tpu_custom_call.1} parent=11 // pred_region
          %s322 = ssub.s32 1024, 1024
          %323 = vsyncadd [#allocation6], %s322
          %s324 = sshll.u32 [#allocation7], 4
          %s325 = int_to_ptr.vmem [resolvable:$true] %s324
          %330 = dma.hbm_to_vmem [thread:$0]  %s2, 1024, %s325, [#allocation6], 64, 64, 4
        $region20: #{tpu_custom_call.1} parent=11 // pred_fallthru
          _
        // Predicated region
        $region21: #{tpu_custom_call.1} parent=11 // pred_check
          %p331 = pneg %p117
        $region22: #{tpu_custom_call.1} parent=11 // pred_check_branch
          %333 = sbr.rel (%p331) target = $region24
        $region23: #{tpu_custom_call.1} parent=11 // pred_region
          %s335 = ssub.s32 16, 16
          %336 = vsyncadd [#allocation9], %s335
          %s338 = sshll.u32 [#allocation8], 4
          %s339 = int_to_ptr.vmem [resolvable:$true] %s338
          %341 = dma.hbm_to_vmem [thread:$0]  %s3, 16, %s339, [#allocation9]
        $region24: #{tpu_custom_call.1} parent=11 // pred_fallthru
          _
        // Predicated region
        $region25: #{tpu_custom_call.1} parent=11 // pred_check
          %p342 = pneg %p138
        $region26: #{tpu_custom_call.1} parent=11 // pred_check_branch
          %344 = sbr.rel (%p342) target = $region28
        $region27: #{tpu_custom_call.1} parent=11 // pred_region
          %s346 = ssub.s32 16, 16
          %347 = vsyncadd [#allocation9], %s346
          %s349 = sshll.u32 [#allocation10], 4
          %s350 = int_to_ptr.vmem [resolvable:$true] %s349
          %352 = dma.hbm_to_vmem [thread:$0]  %s4, 16, %s350, [#allocation9]
        $region28: #{tpu_custom_call.1} parent=11 // pred_fallthru
          _
        // Predicated region
        $region29: #{tpu_custom_call.1} parent=11 // pred_check
          %p353 = pneg %p159
        $region30: #{tpu_custom_call.1} parent=11 // pred_check_branch
          %355 = sbr.rel (%p353) target = $region32
        $region31: #{tpu_custom_call.1} parent=11 // pred_region
          %s357 = ssub.s32 16, 16
          %358 = vsyncadd [#allocation12], %s357
          %s360 = sshll.u32 [#allocation11], 4
          %s361 = int_to_ptr.vmem [resolvable:$true] %s360
          %363 = dma.hbm_to_vmem [thread:$0]  %s5, 16, %s361, [#allocation12]
        $region32: #{tpu_custom_call.1} parent=11 // pred_fallthru
          _
        // Predicated region
        $region33: #{tpu_custom_call.1} parent=11 // pred_check
          %p364 = pneg %p180
        $region34: #{tpu_custom_call.1} parent=11 // pred_check_branch
          %366 = sbr.rel (%p364) target = $region36
        $region35: #{tpu_custom_call.1} parent=11 // pred_region
          %s368 = ssub.s32 16, 16
          %369 = vsyncadd [#allocation12], %s368
          %s371 = sshll.u32 [#allocation13], 4
          %s372 = int_to_ptr.vmem [resolvable:$true] %s371
          %374 = dma.hbm_to_vmem [thread:$0]  %s6, 16, %s372, [#allocation12]
        $region36: #{tpu_custom_call.1} parent=11 // pred_fallthru
          _
        // Predicated region
        $region37: #{tpu_custom_call.1} parent=11 // pred_check
          %p375 = pneg %p201
        $region38: #{tpu_custom_call.1} parent=11 // pred_check_branch
          %377 = sbr.rel (%p375) target = $region40
        $region39: #{tpu_custom_call.1} parent=11 // pred_region
          %s379 = ssub.s32 256, 256
          %380 = vsyncadd [#allocation15], %s379
          %s381 = sshll.u32 [#allocation14], 4
          %s382 = int_to_ptr.vmem [resolvable:$true] %s381
          %387 = dma.hbm_to_vmem [thread:$0]  %s7, 256, %s382, [#allocation15], 64, 64, 4
        $region40: #{tpu_custom_call.1} parent=11 // pred_fallthru
          _
        // Predicated region
        $region41: #{tpu_custom_call.1} parent=11 // pred_check
          %p388 = pneg %p222
        $region42: #{tpu_custom_call.1} parent=11 // pred_check_branch
          %390 = sbr.rel (%p388) target = $region44
        $region43: #{tpu_custom_call.1} parent=11 // pred_region
          %s392 = ssub.s32 16, 16
          %393 = vsyncadd [#allocation15], %s392
          %s395 = sshll.u32 [#allocation16], 4
          %s396 = int_to_ptr.vmem [resolvable:$true] %s395
          %398 = dma.hbm_to_vmem [thread:$0]  %s8, 16, %s396, [#allocation15]
        $region44: #{tpu_custom_call.1} parent=11 // pred_fallthru
          _
        // Predicated region
        $region45: #{tpu_custom_call.1} parent=11 // pred_check
          %p399 = pneg %p243
        $region46: #{tpu_custom_call.1} parent=11 // pred_check_branch
          %401 = sbr.rel (%p399) target = $region48
        $region47: #{tpu_custom_call.1} parent=11 // pred_region
          %s403 = ssub.s32 256, 256
          %404 = vsyncadd [#allocation18], %s403
          %s405 = sshll.u32 [#allocation17], 4
          %s406 = int_to_ptr.vmem [resolvable:$true] %s405
          %411 = dma.hbm_to_vmem [thread:$0]  %s9, 256, %s406, [#allocation18], 64, 64, 4
        $region48: #{tpu_custom_call.1} parent=11 // pred_fallthru
          _
        // Predicated region
        $region49: #{tpu_custom_call.1} parent=11 // pred_check
          %p412 = pneg %p264
        $region50: #{tpu_custom_call.1} parent=11 // pred_check_branch
          %414 = sbr.rel (%p412) target = $region52
        $region51: #{tpu_custom_call.1} parent=11 // pred_region
          %s416 = ssub.s32 16, 16
          %417 = vsyncadd [#allocation18], %s416
          %s419 = sshll.u32 [#allocation19], 4
          %s420 = int_to_ptr.vmem [resolvable:$true] %s419
          %422 = dma.hbm_to_vmem [thread:$0]  %s10, 16, %s420, [#allocation18]
        $region52: #{tpu_custom_call.1} parent=11 // pred_fallthru
          _
      $region12: #{tpu_custom_call.1} parent=5 // pred_fallthru
        _
      %p423 = scmp.lt.s32.totalorder %s28, 2
      // Predicated region
      $region53: #{tpu_custom_call.1} parent=5 // pred_check
        %p424 = pneg %p423
      $region54: #{tpu_custom_call.1} parent=5 // pred_check_branch
        %426 = sbr.rel (%p424) target = $region56
      $region55: #{tpu_custom_call.1} parent=5 // pred_region
        // Predicated region
        $region57: #{tpu_custom_call.1} parent=55 // pred_check
          %p427 = pneg %p48
        $region58: #{tpu_custom_call.1} parent=55 // pred_check_branch
          %429 = sbr.rel (%p427) target = $region60
        $region59: #{tpu_custom_call.1} parent=55 // pred_region
          %s430 = sand.u32 %s38, 1
          %s431 = scalar_lea.sflag [#allocation3], %s430
          %s432 = sand.u32 %s38, 1
          %s433 = smul.addr %s432, 4
          %s434 = scalar_lea.vmem [#allocation2], %s433
          %s436 = ssub.s32 64, 64
          %437 = vsyncadd %s431, %s436
          %s438 = smul.addr %s28, 64
          %s439 = scalar_lea.hbm %s0, %s438
          %s441 = sshll.u32 %s434, 4
          %s442 = int_to_ptr.vmem [resolvable:$true] %s441
          %444 = dma.hbm_to_vmem [thread:$0]  %s439, 64, %s442, %s431
        $region60: #{tpu_custom_call.1} parent=55 // pred_fallthru
          _
      $region56: #{tpu_custom_call.1} parent=5 // pred_fallthru
        _
      %p445 = scmp.le.s32.totalorder 1, %s28
      %p446 = scmp.lt.s32.totalorder %s28, 3
      %p447 = pnand %p445, %p446
      %p448 = pneg %p447
      // Predicated region
      $region61: #{tpu_custom_call.1} parent=5 // pred_check
        _
      $region62: #{tpu_custom_call.1} parent=5 // pred_check_branch
        %450 = sbr.rel (%p447) target = $region64
      $region63: #{tpu_custom_call.1} parent=5 // pred_region
        %s451 = ssub.s32 %s28, 1
        %s452 = sand.u32 %s41, 1
        %s453 = scalar_lea.sflag [#allocation3], %s452
        %s454 = sand.u32 %s41, 1
        %s455 = smul.addr %s454, 4
        %s456 = scalar_lea.vmem [#allocation2], %s455
        // Predicated region
        $region65: #{tpu_custom_call.1} parent=63 // pred_check
          %p457 = pneg %p54
        $region66: #{tpu_custom_call.1} parent=63 // pred_check_branch
          %459 = sbr.rel (%p457) target = $region68
        $region67: #{tpu_custom_call.1} parent=63 // pred_region
          %460 = dma.done %s453, 64
        $region68: #{tpu_custom_call.1} parent=63 // pred_fallthru
          _
        // Predicated region
        $region69: #{tpu_custom_call.1} parent=63 // pred_check
          %p461 = pneg %p75
        $region70: #{tpu_custom_call.1} parent=63 // pred_check_branch
          %463 = sbr.rel (%p461) target = $region72
        $region71: #{tpu_custom_call.1} parent=63 // pred_region
          %464 = dma.done [#allocation6], 1024
        $region72: #{tpu_custom_call.1} parent=63 // pred_fallthru
          _
        // Predicated region
        $region73: #{tpu_custom_call.1} parent=63 // pred_check
          %p465 = pneg %p96
        $region74: #{tpu_custom_call.1} parent=63 // pred_check_branch
          %467 = sbr.rel (%p465) target = $region76
        $region75: #{tpu_custom_call.1} parent=63 // pred_region
          %468 = dma.done [#allocation6], 1024
        $region76: #{tpu_custom_call.1} parent=63 // pred_fallthru
          _
        // Predicated region
        $region77: #{tpu_custom_call.1} parent=63 // pred_check
          %p469 = pneg %p117
        $region78: #{tpu_custom_call.1} parent=63 // pred_check_branch
          %471 = sbr.rel (%p469) target = $region80
        $region79: #{tpu_custom_call.1} parent=63 // pred_region
          %472 = dma.done [#allocation9], 16
        $region80: #{tpu_custom_call.1} parent=63 // pred_fallthru
          _
        // Predicated region
        $region81: #{tpu_custom_call.1} parent=63 // pred_check
          %p473 = pneg %p138
        $region82: #{tpu_custom_call.1} parent=63 // pred_check_branch
          %475 = sbr.rel (%p473) target = $region84
        $region83: #{tpu_custom_call.1} parent=63 // pred_region
          %476 = dma.done [#allocation9], 16
        $region84: #{tpu_custom_call.1} parent=63 // pred_fallthru
          _
        // Predicated region
        $region85: #{tpu_custom_call.1} parent=63 // pred_check
          %p477 = pneg %p159
        $region86: #{tpu_custom_call.1} parent=63 // pred_check_branch
          %479 = sbr.rel (%p477) target = $region88
        $region87: #{tpu_custom_call.1} parent=63 // pred_region
          %480 = dma.done [#allocation12], 16
        $region88: #{tpu_custom_call.1} parent=63 // pred_fallthru
          _
        // Predicated region
        $region89: #{tpu_custom_call.1} parent=63 // pred_check
          %p481 = pneg %p180
        $region90: #{tpu_custom_call.1} parent=63 // pred_check_branch
          %483 = sbr.rel (%p481) target = $region92
        $region91: #{tpu_custom_call.1} parent=63 // pred_region
          %484 = dma.done [#allocation12], 16
        $region92: #{tpu_custom_call.1} parent=63 // pred_fallthru
          _
        // Predicated region
        $region93: #{tpu_custom_call.1} parent=63 // pred_check
          %p485 = pneg %p201
        $region94: #{tpu_custom_call.1} parent=63 // pred_check_branch
          %487 = sbr.rel (%p485) target = $region96
        $region95: #{tpu_custom_call.1} parent=63 // pred_region
          %488 = dma.done [#allocation15], 256
        $region96: #{tpu_custom_call.1} parent=63 // pred_fallthru
          _
        // Predicated region
        $region97: #{tpu_custom_call.1} parent=63 // pred_check
          %p489 = pneg %p222
        $region98: #{tpu_custom_call.1} parent=63 // pred_check_branch
          %491 = sbr.rel (%p489) target = $region100
        $region99: #{tpu_custom_call.1} parent=63 // pred_region
          %492 = dma.done [#allocation15], 16
        $region100: #{tpu_custom_call.1} parent=63 // pred_fallthru
          _
        // Predicated region
        $region101: #{tpu_custom_call.1} parent=63 // pred_check
          %p493 = pneg %p243
        $region102: #{tpu_custom_call.1} parent=63 // pred_check_branch
          %495 = sbr.rel (%p493) target = $region104
        $region103: #{tpu_custom_call.1} parent=63 // pred_region
          %496 = dma.done [#allocation18], 256
        $region104: #{tpu_custom_call.1} parent=63 // pred_fallthru
          _
        // Predicated region
        $region105: #{tpu_custom_call.1} parent=63 // pred_check
          %p497 = pneg %p264
        $region106: #{tpu_custom_call.1} parent=63 // pred_check_branch
          %499 = sbr.rel (%p497) target = $region108
        $region107: #{tpu_custom_call.1} parent=63 // pred_region
          %500 = dma.done [#allocation18], 16
        $region108: #{tpu_custom_call.1} parent=63 // pred_fallthru
          _
        %s501 = sand.u32 %s41, 1
        %s502 = scalar_lea.sflag [#allocation3], %s501
        %s503 = sand.u32 %s41, 1
        %s504 = smul.addr %s503, 4
        %s505 = scalar_lea.vmem [#allocation2], %s504
        %p506 = pneg %p54
        %p507 = pneg %p51
        %p508 = pneg %p75
        %p509 = pneg %p72
        %p510 = pneg %p96
        %p511 = pneg %p93
        %p512 = pneg %p117
        %p513 = pneg %p114
        %p514 = pneg %p138
        %p515 = pneg %p135
        %p516 = pneg %p159
        %p517 = pneg %p156
        %p518 = pneg %p180
        %p519 = pneg %p177
        %p520 = pneg %p201
        %p521 = pneg %p198
        %p522 = pneg %p222
        %p523 = pneg %p219
        %p524 = pneg %p243
        %p525 = pneg %p240
        %p526 = pneg %p264
        %p527 = pneg %p261
        %p528 = pneg %p290
        %p529 = pneg %p287
        %s530 = sand.u32 %s277, 1
        %s531 = scalar_lea.sflag [#allocation4], %s530
        %s532 = sand.u32 %s277, 1
        %s533 = smul.addr %s532, 8
        %s534 = scalar_lea.vmem [#allocation20], %s533
        %v536 = vld [vmem:[%s456] sm:$0xf]
        %v537 = vld [vmem:[#allocation5] sm:$0xf]
        %v538 = vld [vmem:[#allocation5 + $0x4] sm:$0xf]
        %v539 = vld [vmem:[#allocation5 + $0x8] sm:$0xf]
        %v540 = vld [vmem:[#allocation5 + $0xc] sm:$0xf]
        %v541 = vld [vmem:[#allocation5 + $0x10] sm:$0xf]
        %v542 = vld [vmem:[#allocation5 + $0x14] sm:$0xf]
        %v543 = vld [vmem:[#allocation5 + $0x18] sm:$0xf]
        %v544 = vld [vmem:[#allocation5 + $0x1c] sm:$0xf]
        %v545 = vld [vmem:[#allocation5 + $0x20] sm:$0xf]
        %v546 = vld [vmem:[#allocation5 + $0x24] sm:$0xf]
        %v547 = vld [vmem:[#allocation5 + $0x28] sm:$0xf]
        %v548 = vld [vmem:[#allocation5 + $0x2c] sm:$0xf]
        %v549 = vld [vmem:[#allocation5 + $0x30] sm:$0xf]
        %v550 = vld [vmem:[#allocation5 + $0x34] sm:$0xf]
        %v551 = vld [vmem:[#allocation5 + $0x38] sm:$0xf]
        %v552 = vld [vmem:[#allocation5 + $0x3c] sm:$0xf]
        %v553 = vld [vmem:[#allocation8] sm:$0x1]
        %v555 = vlaneseq
        %v556 = vshrl.u32 %v555, 7
        %v557 = vsub.s32 0, %v556
        %v558 = vrot.slane %v553, %v557
        %v576 = vunpack.c.l.b16 %v537
        %v577 = vunpack.c.l.b16 %v538
        %v578 = vunpack.c.l.b16 %v539
        %v579 = vunpack.c.l.b16 %v540
        %v580 = vunpack.c.l.b16 %v541
        %v581 = vunpack.c.l.b16 %v542
        %v582 = vunpack.c.l.b16 %v543
        %v583 = vunpack.c.l.b16 %v544
        %v584 = vunpack.c.l.b16 %v545
        %v585 = vunpack.c.l.b16 %v546
        %v586 = vunpack.c.l.b16 %v547
        %v587 = vunpack.c.l.b16 %v548
        %v588 = vunpack.c.l.b16 %v549
        %v589 = vunpack.c.l.b16 %v550
        %v590 = vunpack.c.l.b16 %v551
        %v591 = vunpack.c.l.b16 %v552
        %v592 = vpack.c.b16 %v577, %v576
        %v593 = vpack.c.b16 %v579, %v578
        %v594 = vpack.c.b16 %v581, %v580
        %v595 = vpack.c.b16 %v583, %v582
        %v596 = vpack.c.b16 %v585, %v584
        %v597 = vpack.c.b16 %v587, %v586
        %v598 = vpack.c.b16 %v589, %v588
        %v599 = vpack.c.b16 %v591, %v590
        %608 = vmatprep.subr.bf16.mxu0 0
        %609 = vmatpush1.bf16.msra.mxu0 %v592
        %610 = vmatprep.subr.bf16.mxu0 0
        %611 = vmatpush1.bf16.msra.mxu0 %v593
        %612 = vmatprep.subr.bf16.mxu0 0
        %613 = vmatpush1.bf16.msra.mxu0 %v594
        %614 = vmatprep.subr.bf16.mxu0 0
        %615 = vmatpush1.bf16.msra.mxu0 %v595
        %616 = vmatprep.subr.bf16.mxu0 0
        %617 = vmatpush1.bf16.msra.mxu0 %v596
        %618 = vmatprep.subr.bf16.mxu0 0
        %619 = vmatpush1.bf16.msra.mxu0 %v597
        %620 = vmatprep.subr.bf16.mxu0 0
        %621 = vmatpush1.bf16.msra.mxu0 %v598
        %622 = vmatprep.subr.bf16.mxu0 0
        %623 = vmatpush1.bf16.msra.mxu0 %v599
        %624 = vmatprep.subr.bf16.mxu0 0
        %625 = vmatpush1.bf16.msra.mxu0 0
        %626 = vmatprep.subr.bf16.mxu0 0
        %627 = vmatpush1.bf16.msra.mxu0 0
        %628 = vmatprep.subr.bf16.mxu0 0
        %629 = vmatpush1.bf16.msra.mxu0 0
        %630 = vmatprep.subr.bf16.mxu0 0
        %631 = vmatpush1.bf16.msra.mxu0 0
        %632 = vmatprep.subr.bf16.mxu0 0
        %633 = vmatpush1.bf16.msra.mxu0 0
        %634 = vmatprep.subr.bf16.mxu0 0
        %635 = vmatpush1.bf16.msra.mxu0 0
        %636 = vmatprep.subr.bf16.mxu0 0
        %637 = vmatpush1.bf16.msra.mxu0 0
        %638 = vmatprep.subr.bf16.mxu0 0
        %639 = vmatpush1.bf16.msra.mxu0 0
        %640 = vmatprep.mubr.bf16.mxu0 0
        %641 = vmatmul.mubr.bf16.gmra.mrb[0].mxu0 %v536
        %v642 = vpop.f32.mrb[0].mxu0
        %v643 = vadd.f32 %v558, %v642
        %v644 = vpop.f32.mrb[0].mxu0
        %v645 = vpop.f32.mrb[0].mxu0
        %v646 = vpop.f32.mrb[0].mxu0
        %647 = vdwg.mxu0
        %v648 = vld [vmem:[#allocation7] sm:$0xf]
        %v649 = vld [vmem:[#allocation7 + $0x4] sm:$0xf]
        %v650 = vld [vmem:[#allocation7 + $0x8] sm:$0xf]
        %v651 = vld [vmem:[#allocation7 + $0xc] sm:$0xf]
        %v652 = vld [vmem:[#allocation7 + $0x10] sm:$0xf]
        %v653 = vld [vmem:[#allocation7 + $0x14] sm:$0xf]
        %v654 = vld [vmem:[#allocation7 + $0x18] sm:$0xf]
        %v655 = vld [vmem:[#allocation7 + $0x1c] sm:$0xf]
        %v656 = vld [vmem:[#allocation7 + $0x20] sm:$0xf]
        %v657 = vld [vmem:[#allocation7 + $0x24] sm:$0xf]
        %v658 = vld [vmem:[#allocation7 + $0x28] sm:$0xf]
        %v659 = vld [vmem:[#allocation7 + $0x2c] sm:$0xf]
        %v660 = vld [vmem:[#allocation7 + $0x30] sm:$0xf]
        %v661 = vld [vmem:[#allocation7 + $0x34] sm:$0xf]
        %v662 = vld [vmem:[#allocation7 + $0x38] sm:$0xf]
        %v663 = vld [vmem:[#allocation7 + $0x3c] sm:$0xf]
        %v664 = vld [vmem:[#allocation10] sm:$0x1]
        %v666 = vlaneseq
        %v667 = vshrl.u32 %v666, 7
        %v668 = vsub.s32 0, %v667
        %v669 = vrot.slane %v664, %v668
        %v687 = vunpack.c.l.b16 %v648
        %v688 = vunpack.c.l.b16 %v649
        %v689 = vunpack.c.l.b16 %v650
        %v690 = vunpack.c.l.b16 %v651
        %v691 = vunpack.c.l.b16 %v652
        %v692 = vunpack.c.l.b16 %v653
        %v693 = vunpack.c.l.b16 %v654
        %v694 = vunpack.c.l.b16 %v655
        %v695 = vunpack.c.l.b16 %v656
        %v696 = vunpack.c.l.b16 %v657
        %v697 = vunpack.c.l.b16 %v658
        %v698 = vunpack.c.l.b16 %v659
        %v699 = vunpack.c.l.b16 %v660
        %v700 = vunpack.c.l.b16 %v661
        %v701 = vunpack.c.l.b16 %v662
        %v702 = vunpack.c.l.b16 %v663
        %v703 = vpack.c.b16 %v688, %v687
        %v704 = vpack.c.b16 %v690, %v689
        %v705 = vpack.c.b16 %v692, %v691
        %v706 = vpack.c.b16 %v694, %v693
        %v707 = vpack.c.b16 %v696, %v695
        %v708 = vpack.c.b16 %v698, %v697
        %v709 = vpack.c.b16 %v700, %v699
        %v710 = vpack.c.b16 %v702, %v701
        %719 = vmatprep.subr.bf16.mxu0 0
        %720 = vmatpush1.bf16.msra.mxu0 %v703
        %721 = vmatprep.subr.bf16.mxu0 0
        %722 = vmatpush1.bf16.msra.mxu0 %v704
        %723 = vmatprep.subr.bf16.mxu0 0
        %724 = vmatpush1.bf16.msra.mxu0 %v705
        %725 = vmatprep.subr.bf16.mxu0 0
        %726 = vmatpush1.bf16.msra.mxu0 %v706
        %727 = vmatprep.subr.bf16.mxu0 0
        %728 = vmatpush1.bf16.msra.mxu0 %v707
        %729 = vmatprep.subr.bf16.mxu0 0
        %730 = vmatpush1.bf16.msra.mxu0 %v708
        %731 = vmatprep.subr.bf16.mxu0 0
        %732 = vmatpush1.bf16.msra.mxu0 %v709
        %733 = vmatprep.subr.bf16.mxu0 0
        %734 = vmatpush1.bf16.msra.mxu0 %v710
        %735 = vmatprep.subr.bf16.mxu0 0
        %736 = vmatpush1.bf16.msra.mxu0 0
        %737 = vmatprep.subr.bf16.mxu0 0
        %738 = vmatpush1.bf16.msra.mxu0 0
        %739 = vmatprep.subr.bf16.mxu0 0
        %740 = vmatpush1.bf16.msra.mxu0 0
        %741 = vmatprep.subr.bf16.mxu0 0
        %742 = vmatpush1.bf16.msra.mxu0 0
        %743 = vmatprep.subr.bf16.mxu0 0
        %744 = vmatpush1.bf16.msra.mxu0 0
        %745 = vmatprep.subr.bf16.mxu0 0
        %746 = vmatpush1.bf16.msra.mxu0 0
        %747 = vmatprep.subr.bf16.mxu0 0
        %748 = vmatpush1.bf16.msra.mxu0 0
        %749 = vmatprep.subr.bf16.mxu0 0
        %750 = vmatpush1.bf16.msra.mxu0 0
        %751 = vmatprep.mubr.bf16.mxu0 0
        %752 = vmatmul.mubr.bf16.gmra.mrb[0].mxu0 %v536
        %v753 = vpop.f32.mrb[0].mxu0
        %v754 = vadd.f32 %v669, %v753
        %v755 = vpop.f32.mrb[0].mxu0
        %v756 = vpop.f32.mrb[0].mxu0
        %v757 = vpop.f32.mrb[0].mxu0
        %758 = vdwg.mxu0
        %v759 = vmul.f32 %v643, 0.5
        %v760 = vmul.f32 %v643, 0.70710677
        %vm761 = vcmp.ge.f32.partialorder %v760, 0.0
        %v762 = vsel %vm761, 1.0, -1.0
        %v763 = vand.u32 2147483647, %v760
        %v764 = vmul.f32 %v763, 0.3275911
        %v765 = vadd.f32 %v764, 1.0
        %v766 = vrcp.pop %v765
        %v767 = vmul.f32 1.0, %v766
        %v768 = vmul.f32 %v767, 1.0614054
        %v769 = vadd.f32 %v768, -1.4531521
        %v770 = vmul.f32 %v767, %v769
        %v771 = vadd.f32 %v770, 1.4214138
        %v772 = vmul.f32 %v767, %v771
        %v773 = vadd.f32 %v772, -0.28449672
        %v774 = vmul.f32 %v767, %v773
        %v775 = vadd.f32 %v774, 0.2548296
        %v776 = vmul.f32 %v767, %v775
        %v777 = vsub.f32 0.0, %v763
        %v778 = vmul.f32 %v777, %v763
        %v779 = vmul.f32 %v778, 1.442695
        %v780 = vpow.pop %v779
        %v781 = vmul.f32 %v776, %v780
        %v782 = vsub.f32 1.0, %v781
        %v783 = vmul.f32 %v762, %v782
        %v784 = vadd.f32 %v783, 1.0
        %v785 = vmul.f32 %v759, %v784
        %v786 = vmul.f32 %v754, 0.5
        %v787 = vmul.f32 %v754, 0.70710677
        %vm788 = vcmp.ge.f32.partialorder %v787, 0.0
        %v789 = vsel %vm788, 1.0, -1.0
        %v790 = vand.u32 2147483647, %v787
        %v791 = vmul.f32 %v790, 0.3275911
        %v792 = vadd.f32 %v791, 1.0
        %v793 = vrcp.pop %v792
        %v794 = vmul.f32 1.0, %v793
        %v795 = vmul.f32 %v794, 1.0614054
        %v796 = vadd.f32 %v795, -1.4531521
        %v797 = vmul.f32 %v794, %v796
        %v798 = vadd.f32 %v797, 1.4214138
        %v799 = vmul.f32 %v794, %v798
        %v800 = vadd.f32 %v799, -0.28449672
        %v801 = vmul.f32 %v794, %v800
        %v802 = vadd.f32 %v801, 0.2548296
        %v803 = vmul.f32 %v794, %v802
        %v804 = vsub.f32 0.0, %v790
        %v805 = vmul.f32 %v804, %v790
        %v806 = vmul.f32 %v805, 1.442695
        %v807 = vpow.pop %v806
        %v808 = vmul.f32 %v803, %v807
        %v809 = vsub.f32 1.0, %v808
        %v810 = vmul.f32 %v789, %v809
        %v811 = vadd.f32 %v810, 1.0
        %v812 = vmul.f32 %v786, %v811
        %vm813 = vcmask 261120
        %v814 = vsel %vm813, %v812, 0.0
        %815 = vadd.xlane.f32.xlu0 %v814
        %v816 = vpop.xlane.xlu0 %815
        %v817 = vmul.f32 %v816, 0.03125
        %v818 = vsub.f32 %v812, %v817
        %v819 = vmul.f32 %v818, %v818
        %v820 = vsel %vm813, %v819, 0.0
        %821 = vadd.xlane.f32.xlu0 %v820
        %v822 = vpop.xlane.xlu0 %821
        %v823 = vmul.f32 %v822, 0.03125
        %v824 = vadd.f32 %v823, 1e-05
        %v825 = vrsqrt.pop %v824
        %v826 = vmul.f32 %v818, %v825
        %v827 = vld [vmem:[#allocation11] sm:$0x1]
        %v829 = vlaneseq
        %v830 = vshrl.u32 %v829, 7
        %v831 = vsub.s32 0, %v830
        %v832 = vrot.slane %v827, %v831
        %v834 = vmul.f32 %v826, %v832
        %v835 = vld [vmem:[#allocation13] sm:$0x1]
        %v837 = vlaneseq
        %v838 = vshrl.u32 %v837, 7
        %v839 = vsub.s32 0, %v838
        %v840 = vrot.slane %v835, %v839
        %v842 = vadd.f32 %v834, %v840
        %v843 = vpack.c.bf16 %v842, %v842
        %v844 = vld [vmem:[#allocation14] sm:$0xf]
        %v845 = vld [vmem:[#allocation14 + $0x4] sm:$0xf]
        %v846 = vld [vmem:[#allocation14 + $0x8] sm:$0xf]
        %v847 = vld [vmem:[#allocation14 + $0xc] sm:$0xf]
        %v848 = vld [vmem:[#allocation16] sm:$0x1]
        %v850 = vlaneseq
        %v851 = vshrl.u32 %v850, 7
        %v852 = vsub.s32 0, %v851
        %v853 = vrot.slane %v848, %v852
        %v859 = vunpack.c.l.b16 %v844
        %v860 = vunpack.c.l.b16 %v845
        %v861 = vunpack.c.l.b16 %v846
        %v862 = vunpack.c.l.b16 %v847
        %v863 = vpack.c.b16 %v860, %v859
        %v864 = vpack.c.b16 %v862, %v861
        %v868 = vsel %vm813, %v843, 0
        %870 = vmatprep.subr.bf16.mxu0 0
        %871 = vmatpush1.bf16.msra.mxu0 %v863
        %872 = vmatprep.subr.bf16.mxu0 0
        %873 = vmatpush1.bf16.msra.mxu0 %v864
        %874 = vmatprep.subr.bf16.mxu0 0
        %875 = vmatpush1.bf16.msra.mxu0 0
        %876 = vmatprep.subr.bf16.mxu0 0
        %877 = vmatpush1.bf16.msra.mxu0 0
        %878 = vmatprep.subr.bf16.mxu0 0
        %879 = vmatpush1.bf16.msra.mxu0 0
        %880 = vmatprep.subr.bf16.mxu0 0
        %881 = vmatpush1.bf16.msra.mxu0 0
        %882 = vmatprep.subr.bf16.mxu0 0
        %883 = vmatpush1.bf16.msra.mxu0 0
        %884 = vmatprep.subr.bf16.mxu0 0
        %885 = vmatpush1.bf16.msra.mxu0 0
        %886 = vmatprep.subr.bf16.mxu0 0
        %887 = vmatpush1.bf16.msra.mxu0 0
        %888 = vmatprep.subr.bf16.mxu0 0
        %889 = vmatpush1.bf16.msra.mxu0 0
        %890 = vmatprep.subr.bf16.mxu0 0
        %891 = vmatpush1.bf16.msra.mxu0 0
        %892 = vmatprep.subr.bf16.mxu0 0
        %893 = vmatpush1.bf16.msra.mxu0 0
        %894 = vmatprep.subr.bf16.mxu0 0
        %895 = vmatpush1.bf16.msra.mxu0 0
        %896 = vmatprep.subr.bf16.mxu0 0
        %897 = vmatpush1.bf16.msra.mxu0 0
        %898 = vmatprep.subr.bf16.mxu0 0
        %899 = vmatpush1.bf16.msra.mxu0 0
        %900 = vmatprep.subr.bf16.mxu0 0
        %901 = vmatpush1.bf16.msra.mxu0 0
        %902 = vmatprep.mubr.bf16.mxu0 0
        %903 = vmatmul.mubr.bf16.gmra.mrb[0].mxu0 %v868
        %v904 = vpop.f32.mrb[0].mxu0
        %v905 = vadd.f32 %v853, %v904
        %v906 = vpop.f32.mrb[0].mxu0
        %v907 = vpop.f32.mrb[0].mxu0
        %v908 = vpop.f32.mrb[0].mxu0
        %909 = vdwg.mxu0
        %v910 = vpack.c.bf16 %v905, %v905
        %v911 = vpack.c.bf16 %v785, %v785
        %vm912 = vcmask 64512
        %v914 = vsel %vm912, %v910, 0
        %vm916 = vcmask 1043456
        %v918 = vsel %vm916, %v911, 0
        %920 = vmatprep.subr.bf16.mxu0 0
        %921 = vmatpush1.bf16.msra.mxu0 %v918
        %922 = vmatprep.subr.bf16.mxu0 0
        %923 = vmatpush1.bf16.msra.mxu0 0
        %924 = vmatprep.subr.bf16.mxu0 0
        %925 = vmatpush1.bf16.msra.mxu0 0
        %926 = vmatprep.subr.bf16.mxu0 0
        %927 = vmatpush1.bf16.msra.mxu0 0
        %928 = vmatprep.subr.bf16.mxu0 0
        %929 = vmatpush1.bf16.msra.mxu0 0
        %930 = vmatprep.subr.bf16.mxu0 0
        %931 = vmatpush1.bf16.msra.mxu0 0
        %932 = vmatprep.subr.bf16.mxu0 0
        %933 = vmatpush1.bf16.msra.mxu0 0
        %934 = vmatprep.subr.bf16.mxu0 0
        %935 = vmatpush1.bf16.msra.mxu0 0
        %936 = vmatprep.subr.bf16.mxu0 0
        %937 = vmatpush1.bf16.msra.mxu0 0
        %938 = vmatprep.subr.bf16.mxu0 0
        %939 = vmatpush1.bf16.msra.mxu0 0
        %940 = vmatprep.subr.bf16.mxu0 0
        %941 = vmatpush1.bf16.msra.mxu0 0
        %942 = vmatprep.subr.bf16.mxu0 0
        %943 = vmatpush1.bf16.msra.mxu0 0
        %944 = vmatprep.subr.bf16.mxu0 0
        %945 = vmatpush1.bf16.msra.mxu0 0
        %946 = vmatprep.subr.bf16.mxu0 0
        %947 = vmatpush1.bf16.msra.mxu0 0
        %948 = vmatprep.subr.bf16.mxu0 0
        %949 = vmatpush1.bf16.msra.mxu0 0
        %950 = vmatprep.subr.bf16.mxu0 0
        %951 = vmatpush1.bf16.msra.mxu0 0
        %952 = vmatprep.mubr.bf16.mxu0 0
        %953 = vmatmul.mubr.bf16.gmra.mrb[0].mxu0 %v914
        %v954 = vpop.f32.mrb[0].mxu0
        %v955 = vadd.f32 0.0, %v954
        %v956 = vpop.f32.mrb[0].mxu0
        %v957 = vpop.f32.mrb[0].mxu0
        %v958 = vpop.f32.mrb[0].mxu0
        %959 = vdwg.mxu0
        %v960 = vpack.c.bf16 %v955, %v955
        %v961 = vld [vmem:[#allocation17] sm:$0xf]
        %v962 = vld [vmem:[#allocation17 + $0x4] sm:$0xf]
        %v963 = vld [vmem:[#allocation17 + $0x8] sm:$0xf]
        %v964 = vld [vmem:[#allocation17 + $0xc] sm:$0xf]
        %v965 = vld [vmem:[#allocation19] sm:$0x1]
        %v967 = vlaneseq
        %v968 = vshrl.u32 %v967, 7
        %v969 = vsub.s32 0, %v968
        %v970 = vrot.slane %v965, %v969
        %v976 = vunpack.c.l.b16 %v961
        %v977 = vunpack.c.l.b16 %v962
        %v978 = vunpack.c.l.b16 %v963
        %v979 = vunpack.c.l.b16 %v964
        %v980 = vpack.c.b16 %v977, %v976
        %v981 = vpack.c.b16 %v979, %v978
        %v985 = vsel %vm813, %v960, 0
        %987 = vmatprep.subr.bf16.mxu0 0
        %988 = vmatpush1.bf16.msra.mxu0 %v980
        %989 = vmatprep.subr.bf16.mxu0 0
        %990 = vmatpush1.bf16.msra.mxu0 %v981
        %991 = vmatprep.subr.bf16.mxu0 0
        %992 = vmatpush1.bf16.msra.mxu0 0
        %993 = vmatprep.subr.bf16.mxu0 0
        %994 = vmatpush1.bf16.msra.mxu0 0
        %995 = vmatprep.subr.bf16.mxu0 0
        %996 = vmatpush1.bf16.msra.mxu0 0
        %997 = vmatprep.subr.bf16.mxu0 0
        %998 = vmatpush1.bf16.msra.mxu0 0
        %999 = vmatprep.subr.bf16.mxu0 0
        %1000 = vmatpush1.bf16.msra.mxu0 0
        %1001 = vmatprep.subr.bf16.mxu0 0
        %1002 = vmatpush1.bf16.msra.mxu0 0
        %1003 = vmatprep.subr.bf16.mxu0 0
        %1004 = vmatpush1.bf16.msra.mxu0 0
        %1005 = vmatprep.subr.bf16.mxu0 0
        %1006 = vmatpush1.bf16.msra.mxu0 0
        %1007 = vmatprep.subr.bf16.mxu0 0
        %1008 = vmatpush1.bf16.msra.mxu0 0
        %1009 = vmatprep.subr.bf16.mxu0 0
        %1010 = vmatpush1.bf16.msra.mxu0 0
        %1011 = vmatprep.subr.bf16.mxu0 0
        %1012 = vmatpush1.bf16.msra.mxu0 0
        %1013 = vmatprep.subr.bf16.mxu0 0
        %1014 = vmatpush1.bf16.msra.mxu0 0
        %1015 = vmatprep.subr.bf16.mxu0 0
        %1016 = vmatpush1.bf16.msra.mxu0 0
        %1017 = vmatprep.subr.bf16.mxu0 0
        %1018 = vmatpush1.bf16.msra.mxu0 0
        %1019 = vmatprep.mubr.bf16.mxu0 0
        %1020 = vmatmul.mubr.bf16.gmra.mrb[0].mxu0 %v985
        %v1021 = vpop.f32.mrb[0].mxu0
        %v1022 = vadd.f32 %v970, %v1021
        %v1023 = vpop.f32.mrb[0].mxu0
        %v1024 = vpop.f32.mrb[0].mxu0
        %v1025 = vpop.f32.mrb[0].mxu0
        %1026 = vdwg.mxu0
        %1027 = vst [vmem:[%s534] sm:$0xff] %v1022
        %s1028 = sand.u32 %s277, 1
        %s1029 = scalar_lea.sflag [#allocation4], %s1028
        %s1030 = sand.u32 %s277, 1
        %s1031 = smul.addr %s1030, 8
        %s1032 = scalar_lea.vmem [#allocation20], %s1031
        // Predicated region
        $region109: #{tpu_custom_call.1} parent=63 // pred_check
          %p1033 = pneg %p287
        $region110: #{tpu_custom_call.1} parent=63 // pred_check_branch
          %1035 = sbr.rel (%p1033) target = $region112
        $region111: #{tpu_custom_call.1} parent=63 // pred_region
          %s1037 = ssub.s32 128, 128
          %1038 = vsyncadd %s1029, %s1037
          %s1039 = smul.addr %s33, 128
          %s1040 = scalar_lea.hbm %s11, %s1039
          %s1042 = sshll.u32 %s1032, 4
          %s1043 = int_to_ptr.vmem [resolvable:$true] %s1042
          %1045 = dma.vmem_to_hbm [thread:$0]  %s1043, 128, %s1040, %s1029
        $region112: #{tpu_custom_call.1} parent=63 // pred_fallthru
          _
      $region64: #{tpu_custom_call.1} parent=5 // pred_fallthru
        _
      %p1046 = scmp.le.s32.totalorder 2, %s28
      // Predicated region
      $region113: #{tpu_custom_call.1} parent=5 // pred_check
        %p1047 = pneg %p1046
      $region114: #{tpu_custom_call.1} parent=5 // pred_check_branch
        %1049 = sbr.rel (%p1047) target = $region116
      $region115: #{tpu_custom_call.1} parent=5 // pred_region
        %s1050 = ssub.s32 %s28, 2
        // Predicated region
        $region117: #{tpu_custom_call.1} parent=115 // pred_check
          %p1051 = pneg %p293
        $region118: #{tpu_custom_call.1} parent=115 // pred_check_branch
          %1053 = sbr.rel (%p1051) target = $region120
        $region119: #{tpu_custom_call.1} parent=115 // pred_region
          %s1054 = sand.u32 %s278, 1
          %s1055 = scalar_lea.sflag [#allocation4], %s1054
          %s1056 = sand.u32 %s278, 1
          %s1057 = smul.addr %s1056, 8
          %s1058 = scalar_lea.vmem [#allocation20], %s1057
          %1059 = dma.done %s1055, 128
        $region120: #{tpu_custom_call.1} parent=115 // pred_fallthru
          _
      $region116: #{tpu_custom_call.1} parent=5 // pred_fallthru
        _
    $region6: #{tpu_custom_call.1} parent=1 // loop_footer
      %s32 = sadd.s32 1, %s28
    $region7: #{tpu_custom_call.1} parent=1 // loop_footer_branch
      %27 = sbr.rel target = $region3
    $region8: #{tpu_custom_call.1} parent=1 // loop_exit
      _
    %1060 = vsyncpa [#allocation3], 1
    %s1061 = scalar_lea.sflag [#allocation3], 1
    %1062 = vsyncpa %s1061, 1
    %1063 = vsyncpa [#allocation6], 1
    %1064 = vsyncpa [#allocation9], 1
    %1065 = vsyncpa [#allocation12], 1
    %1066 = vsyncpa [#allocation15], 1
    %1067 = vsyncpa [#allocation18], 1
    %1068 = vsyncpa [#allocation4], 1
    %s1069 = scalar_lea.sflag [#allocation4], 1
    %1070 = vsyncpa %s1069, 1

// kernel: tpu_custom_call.1
$region0: #{tpu_custom_call.1}
  #allocation0 [shape = 'u32[]', space=smem, size = 0x4, offset = 0x4, fixed_abs, tag = 'smem constant byte address 0x4 - core index']
  #allocation1 [shape = 'u32[144,128]{1,0:T(1,128)}', space=vmem, size = 0x12000, scoped, tag = 'internal scratch']
  %s0 = inlined_call_operand.hbm [shape: bf16[2,8,128], index: 0, kind: input, shape index: {}]
  %s1 = inlined_call_operand.hbm [shape: bf16[128,32], index: 1, kind: input, shape index: {}]
  %s2 = inlined_call_operand.hbm [shape: bf16[128,32], index: 2, kind: input, shape index: {}]
  %s3 = inlined_call_operand.hbm [shape: f32[1,32], index: 3, kind: input, shape index: {}]
  %s4 = inlined_call_operand.hbm [shape: f32[1,32], index: 4, kind: input, shape index: {}]
  %s5 = inlined_call_operand.hbm [shape: f32[1,32], index: 5, kind: input, shape index: {}]
  %s6 = inlined_call_operand.hbm [shape: f32[1,32], index: 6, kind: input, shape index: {}]
  %s7 = inlined_call_operand.hbm [shape: bf16[32,8], index: 7, kind: input, shape index: {}]
  %s8 = inlined_call_operand.hbm [shape: f32[1,8], index: 8, kind: input, shape index: {}]
  %s9 = inlined_call_operand.hbm [shape: bf16[32,128], index: 9, kind: input, shape index: {}]
  %s10 = inlined_call_operand.hbm [shape: f32[1,128], index: 10, kind: input, shape index: {}]
  %s11 = inlined_call_operand.hbm [shape: f32[2,8,128], index: 11, kind: output, shape index: {}]
  %s12 = sld [smem:[#allocation0]]
  $region121: #{tpu_custom_call.1} parent=0
    _
  %s14 = ssub.s32 1, %s12
  %s15 = scalar_select 0, %s14, %s12
  $region1: #{tpu_custom_call.1} parent=0
    #allocation2 [shape = 'u8[4096]{0}', space=vmem, size = 0x1000, scoped, tag = 'input window, operand 0']
    #allocation3 [shape = 's32[2]{0}', space=sflag, size = 0x8, scoped, tag = 'scoped memory for tpu_custom_call.1']
    #allocation4 [shape = 's32[2]{0}', space=sflag, size = 0x8, scoped, tag = 'scoped memory for tpu_custom_call.1']
    #allocation5 [shape = 'u8[32768]{0}', space=vmem, size = 0x8000, scoped, tag = 'input window, operand 1, single buffered']
    #allocation6 [shape = 's32[1]{0}', space=sflag, size = 0x4, scoped, tag = 'scoped memory for tpu_custom_call.1']
    #allocation7 [shape = 'u8[32768]{0}', space=vmem, size = 0x8000, scoped, tag = 'input window, operand 2, single buffered']
    #allocation8 [shape = 'u8[512]{0}', space=vmem, size = 0x400, scoped, tag = 'input window, operand 3, single buffered']
    #allocation9 [shape = 's32[1]{0}', space=sflag, size = 0x4, scoped, tag = 'scoped memory for tpu_custom_call.1']
    #allocation10 [shape = 'u8[512]{0}', space=vmem, size = 0x400, scoped, tag = 'input window, operand 4, single buffered']
    #allocation11 [shape = 'u8[512]{0}', space=vmem, size = 0x400, scoped, tag = 'input window, operand 5, single buffered']
    #allocation12 [shape = 's32[1]{0}', space=sflag, size = 0x4, scoped, tag = 'scoped memory for tpu_custom_call.1']
    #allocation13 [shape = 'u8[512]{0}', space=vmem, size = 0x400, scoped, tag = 'input window, operand 6, single buffered']
    #allocation14 [shape = 'u8[8192]{0}', space=vmem, size = 0x2000, scoped, tag = 'input window, operand 7, single buffered']
    #allocation15 [shape = 's32[1]{0}', space=sflag, size = 0x4, scoped, tag = 'scoped memory for tpu_custom_call.1']
    #allocation16 [shape = 'u8[512]{0}', space=vmem, size = 0x400, scoped, tag = 'input window, operand 8, single buffered']
    #allocation17 [shape = 'u8[8192]{0}', space=vmem, size = 0x2000, scoped, tag = 'input window, operand 9, single buffered']
    #allocation18 [shape = 's32[1]{0}', space=sflag, size = 0x4, scoped, tag = 'scoped memory for tpu_custom_call.1']
    #allocation19 [shape = 'u8[512]{0}', space=vmem, size = 0x400, scoped, tag = 'input window, operand 10, single buffered']
    #allocation20 [shape = 'u8[8192]{0}', space=vmem, size = 0x2000, scoped, tag = 'output window, operand 0']
    %16 = vsyncpa [#allocation3], 0
    %s17 = scalar_lea.sflag [#allocation3], 1
    %18 = vsyncpa %s17, 0
    %19 = vsyncpa [#allocation6], 0
    %20 = vsyncpa [#allocation9], 0
    %21 = vsyncpa [#allocation12], 0
    %22 = vsyncpa [#allocation15], 0
    %23 = vsyncpa [#allocation18], 0
    %24 = vsyncpa [#allocation4], 0
    %s25 = scalar_lea.sflag [#allocation4], 1
    %26 = vsyncpa %s25, 0
    loop: start=0, step=1, limit=4
    $region2: #{tpu_custom_call.1} parent=1 // loop_pre_header
      _
    $region3: #{tpu_custom_call.1} parent=1 // loop_header
      %s28 = sphi 0, %s32
      %p29 = scmp.ge.s32.totalorder %s28, 4
      %s38 = sphi 0, %s40
      %s41 = sphi 0, %s38
      %s42 = sphi 0, %s41
      %s58 = sphi 0, %s42
      %s62 = sphi 0, %s62
      %s64 = sphi 0, %s62
      %s65 = sphi 0, %s64
      %s79 = sphi 0, %s65
      %s83 = sphi 0, %s83
      %s85 = sphi 0, %s83
      %s86 = sphi 0, %s85
      %s100 = sphi 0, %s86
      %s104 = sphi 0, %s104
      %s106 = sphi 0, %s104
      %s107 = sphi 0, %s106
      %s121 = sphi 0, %s107
      %s125 = sphi 0, %s125
      %s127 = sphi 0, %s125
      %s128 = sphi 0, %s127
      %s142 = sphi 0, %s128
      %s146 = sphi 0, %s146
      %s148 = sphi 0, %s146
      %s149 = sphi 0, %s148
      %s163 = sphi 0, %s149
      %s167 = sphi 0, %s167
      %s169 = sphi 0, %s167
      %s170 = sphi 0, %s169
      %s184 = sphi 0, %s170
      %s188 = sphi 0, %s188
      %s190 = sphi 0, %s188
      %s191 = sphi 0, %s190
      %s205 = sphi 0, %s191
      %s209 = sphi 0, %s209
      %s211 = sphi 0, %s209
      %s212 = sphi 0, %s211
      %s226 = sphi 0, %s212
      %s230 = sphi 0, %s230
      %s232 = sphi 0, %s230
      %s233 = sphi 0, %s232
      %s247 = sphi 0, %s233
      %s251 = sphi 0, %s251
      %s253 = sphi 0, %s251
      %s254 = sphi 0, %s253
      %s268 = sphi 0, %s254
      %s274 = sphi 0, %s276
      %s277 = sphi 0, %s274
      %s278 = sphi 0, %s277
      %s294 = sphi 0, %s278
    $region4: #{tpu_custom_call.1} parent=1 // loop_header_branch
      %31 = sbr.rel (%p29) target = $region8
    $region5: #{tpu_custom_call.1} parent=1 // loop_body
      %s33 = ssub.s32 %s28, 1
      %s34 = ssub.s32 %s28, 2
      %s35 = sadd.s32 %s28, 1
      %s36 = ssub.s32 %s28, %s35
      %p37 = scmp.eq.s32.totalorder %s36, 0
      %s39 = sadd.s32 %s38, 1
      %s40 = scalar_select %p37, %s38, %s39
      %p43 = pneg %p37
      %p44 = scmp.eq.s32.totalorder %s28, 1
      %p45 = por %p43, %p44
      %p46 = scmp.ne.s32.totalorder %s38, %s41
      %p47 = scmp.eq.s32.totalorder %s28, 0
      %p48 = por %p46, %p47
      %p49 = scmp.ne.s32.totalorder %s38, %s41
      %p50 = scmp.eq.s32.totalorder %s33, 1
      %p51 = por %p49, %p50
      %p52 = scmp.ne.s32.totalorder %s41, %s42
      %p53 = scmp.eq.s32.totalorder %s33, 0
      %p54 = por %p52, %p53
      %p55 = scmp.ne.s32.totalorder %s41, %s42
      %p56 = scmp.eq.s32.totalorder %s34, 1
      %p57 = por %p55, %p56
      %p59 = scmp.ne.s32.totalorder %s42, %s58
      %p60 = scmp.eq.s32.totalorder %s34, 0
      %p61 = por %p59, %p60
      %s63 = sadd.s32 %s62, 1
      %p66 = scmp.eq.s32.totalorder %s28, 1
      %p67 = scmp.ne.s32.totalorder %s62, %s64
      %p68 = scmp.eq.s32.totalorder %s28, 0
      %p69 = por %p67, %p68
      %p70 = scmp.ne.s32.totalorder %s62, %s64
      %p71 = scmp.eq.s32.totalorder %s33, 1
      %p72 = por %p70, %p71
      %p73 = scmp.ne.s32.totalorder %s64, %s65
      %p74 = scmp.eq.s32.totalorder %s33, 0
      %p75 = por %p73, %p74
      %p76 = scmp.ne.s32.totalorder %s64, %s65
      %p77 = scmp.eq.s32.totalorder %s34, 1
      %p78 = por %p76, %p77
      %p80 = scmp.ne.s32.totalorder %s65, %s79
      %p81 = scmp.eq.s32.totalorder %s34, 0
      %p82 = por %p80, %p81
      %s84 = sadd.s32 %s83, 1
      %p87 = scmp.eq.s32.totalorder %s28, 1
      %p88 = scmp.ne.s32.totalorder %s83, %s85
      %p89 = scmp.eq.s32.totalorder %s28, 0
      %p90 = por %p88, %p89
      %p91 = scmp.ne.s32.totalorder %s83, %s85
      %p92 = scmp.eq.s32.totalorder %s33, 1
      %p93 = por %p91, %p92
      %p94 = scmp.ne.s32.totalorder %s85, %s86
      %p95 = scmp.eq.s32.totalorder %s33, 0
      %p96 = por %p94, %p95
      %p97 = scmp.ne.s32.totalorder %s85, %s86
      %p98 = scmp.eq.s32.totalorder %s34, 1
      %p99 = por %p97, %p98
      %p101 = scmp.ne.s32.totalorder %s86, %s100
      %p102 = scmp.eq.s32.totalorder %s34, 0
      %p103 = por %p101, %p102
      %s105 = sadd.s32 %s104, 1
      %p108 = scmp.eq.s32.totalorder %s28, 1
      %p109 = scmp.ne.s32.totalorder %s104, %s106
      %p110 = scmp.eq.s32.totalorder %s28, 0
      %p111 = por %p109, %p110
      %p112 = scmp.ne.s32.totalorder %s104, %s106
      %p113 = scmp.eq.s32.totalorder %s33, 1
      %p114 = por %p112, %p113
      %p115 = scmp.ne.s32.totalorder %s106, %s107
      %p116 = scmp.eq.s32.totalorder %s33, 0
      %p117 = por %p115, %p116
      %p118 = scmp.ne.s32.totalorder %s106, %s107
      %p119 = scmp.eq.s32.totalorder %s34, 1
      %p120 = por %p118, %p119
      %p122 = scmp.ne.s32.totalorder %s107, %s121
      %p123 = scmp.eq.s32.totalorder %s34, 0
      %p124 = por %p122, %p123
      %s126 = sadd.s32 %s125, 1
      %p129 = scmp.eq.s32.totalorder %s28, 1
      %p130 = scmp.ne.s32.totalorder %s125, %s127
      %p131 = scmp.eq.s32.totalorder %s28, 0
      %p132 = por %p130, %p131
      %p133 = scmp.ne.s32.totalorder %s125, %s127
      %p134 = scmp.eq.s32.totalorder %s33, 1
      %p135 = por %p133, %p134
      %p136 = scmp.ne.s32.totalorder %s127, %s128
      %p137 = scmp.eq.s32.totalorder %s33, 0
      %p138 = por %p136, %p137
      %p139 = scmp.ne.s32.totalorder %s127, %s128
      %p140 = scmp.eq.s32.totalorder %s34, 1
      %p141 = por %p139, %p140
      %p143 = scmp.ne.s32.totalorder %s128, %s142
      %p144 = scmp.eq.s32.totalorder %s34, 0
      %p145 = por %p143, %p144
      %s147 = sadd.s32 %s146, 1
      %p150 = scmp.eq.s32.totalorder %s28, 1
      %p151 = scmp.ne.s32.totalorder %s146, %s148
      %p152 = scmp.eq.s32.totalorder %s28, 0
      %p153 = por %p151, %p152
      %p154 = scmp.ne.s32.totalorder %s146, %s148
      %p155 = scmp.eq.s32.totalorder %s33, 1
      %p156 = por %p154, %p155
      %p157 = scmp.ne.s32.totalorder %s148, %s149
      %p158 = scmp.eq.s32.totalorder %s33, 0
      %p159 = por %p157, %p158
      %p160 = scmp.ne.s32.totalorder %s148, %s149
      %p161 = scmp.eq.s32.totalorder %s34, 1
      %p162 = por %p160, %p161
      %p164 = scmp.ne.s32.totalorder %s149, %s163
      %p165 = scmp.eq.s32.totalorder %s34, 0
      %p166 = por %p164, %p165
      %s168 = sadd.s32 %s167, 1
      %p171 = scmp.eq.s32.totalorder %s28, 1
      %p172 = scmp.ne.s32.totalorder %s167, %s169
      %p173 = scmp.eq.s32.totalorder %s28, 0
      %p174 = por %p172, %p173
      %p175 = scmp.ne.s32.totalorder %s167, %s169
      %p176 = scmp.eq.s32.totalorder %s33, 1
      %p177 = por %p175, %p176
      %p178 = scmp.ne.s32.totalorder %s169, %s170
      %p179 = scmp.eq.s32.totalorder %s33, 0
      %p180 = por %p178, %p179
      %p181 = scmp.ne.s32.totalorder %s169, %s170
      %p182 = scmp.eq.s32.totalorder %s34, 1
      %p183 = por %p181, %p182
      %p185 = scmp.ne.s32.totalorder %s170, %s184
      %p186 = scmp.eq.s32.totalorder %s34, 0
      %p187 = por %p185, %p186
      %s189 = sadd.s32 %s188, 1
      %p192 = scmp.eq.s32.totalorder %s28, 1
      %p193 = scmp.ne.s32.totalorder %s188, %s190
      %p194 = scmp.eq.s32.totalorder %s28, 0
      %p195 = por %p193, %p194
      %p196 = scmp.ne.s32.totalorder %s188, %s190
      %p197 = scmp.eq.s32.totalorder %s33, 1
      %p198 = por %p196, %p197
      %p199 = scmp.ne.s32.totalorder %s190, %s191
      %p200 = scmp.eq.s32.totalorder %s33, 0
      %p201 = por %p199, %p200
      %p202 = scmp.ne.s32.totalorder %s190, %s191
      %p203 = scmp.eq.s32.totalorder %s34, 1
      %p204 = por %p202, %p203
      %p206 = scmp.ne.s32.totalorder %s191, %s205
      %p207 = scmp.eq.s32.totalorder %s34, 0
      %p208 = por %p206, %p207
      %s210 = sadd.s32 %s209, 1
      %p213 = scmp.eq.s32.totalorder %s28, 1
      %p214 = scmp.ne.s32.totalorder %s209, %s211
      %p215 = scmp.eq.s32.totalorder %s28, 0
      %p216 = por %p214, %p215
      %p217 = scmp.ne.s32.totalorder %s209, %s211
      %p218 = scmp.eq.s32.totalorder %s33, 1
      %p219 = por %p217, %p218
      %p220 = scmp.ne.s32.totalorder %s211, %s212
      %p221 = scmp.eq.s32.totalorder %s33, 0
      %p222 = por %p220, %p221
      %p223 = scmp.ne.s32.totalorder %s211, %s212
      %p224 = scmp.eq.s32.totalorder %s34, 1
      %p225 = por %p223, %p224
      %p227 = scmp.ne.s32.totalorder %s212, %s226
      %p228 = scmp.eq.s32.totalorder %s34, 0
      %p229 = por %p227, %p228
      %s231 = sadd.s32 %s230, 1
      %p234 = scmp.eq.s32.totalorder %s28, 1
      %p235 = scmp.ne.s32.totalorder %s230, %s232
      %p236 = scmp.eq.s32.totalorder %s28, 0
      %p237 = por %p235, %p236
      %p238 = scmp.ne.s32.totalorder %s230, %s232
      %p239 = scmp.eq.s32.totalorder %s33, 1
      %p240 = por %p238, %p239
      %p241 = scmp.ne.s32.totalorder %s232, %s233
      %p242 = scmp.eq.s32.totalorder %s33, 0
      %p243 = por %p241, %p242
      %p244 = scmp.ne.s32.totalorder %s232, %s233
      %p245 = scmp.eq.s32.totalorder %s34, 1
      %p246 = por %p244, %p245
      %p248 = scmp.ne.s32.totalorder %s233, %s247
      %p249 = scmp.eq.s32.totalorder %s34, 0
      %p250 = por %p248, %p249
      %s252 = sadd.s32 %s251, 1
      %p255 = scmp.eq.s32.totalorder %s28, 1
      %p256 = scmp.ne.s32.totalorder %s251, %s253
      %p257 = scmp.eq.s32.totalorder %s28, 0
      %p258 = por %p256, %p257
      %p259 = scmp.ne.s32.totalorder %s251, %s253
      %p260 = scmp.eq.s32.totalorder %s33, 1
      %p261 = por %p259, %p260
      %p262 = scmp.ne.s32.totalorder %s253, %s254
      %p263 = scmp.eq.s32.totalorder %s33, 0
      %p264 = por %p262, %p263
      %p265 = scmp.ne.s32.totalorder %s253, %s254
      %p266 = scmp.eq.s32.totalorder %s34, 1
      %p267 = por %p265, %p266
      %p269 = scmp.ne.s32.totalorder %s254, %s268
      %p270 = scmp.eq.s32.totalorder %s34, 0
      %p271 = por %p269, %p270
      %s272 = ssub.s32 %s28, %s35
      %p273 = scmp.eq.s32.totalorder %s272, 0
      %s275 = sadd.s32 %s274, 1
      %s276 = scalar_select %p273, %s274, %s275
      %p279 = pneg %p273
      %p280 = scmp.eq.s32.totalorder %s28, 1
      %p281 = por %p279, %p280
      %p282 = scmp.ne.s32.totalorder %s274, %s277
      %p283 = scmp.eq.s32.totalorder %s28, 0
      %p284 = por %p282, %p283
      %p285 = scmp.ne.s32.totalorder %s274, %s277
      %p286 = scmp.eq.s32.totalorder %s33, 1
      %p287 = por %p285, %p286
      %p288 = scmp.ne.s32.totalorder %s277, %s278
      %p289 = scmp.eq.s32.totalorder %s33, 0
      %p290 = por %p288, %p289
      %p291 = scmp.ne.s32.totalorder %s277, %s278
      %p292 = scmp.eq.s32.totalorder %s34, 1
      %p293 = por %p291, %p292
      %p295 = scmp.ne.s32.totalorder %s278, %s294
      %p296 = scmp.eq.s32.totalorder %s34, 0
      %p297 = por %p295, %p296
      %p298 = scmp.le.s32.totalorder 1, %s28
      %p299 = scmp.lt.s32.totalorder %s28, 3
      %p300 = pnand %p298, %p299
      %p301 = pneg %p300
      // Predicated region
      $region9: #{tpu_custom_call.1} parent=5 // pred_check
        _
      $region10: #{tpu_custom_call.1} parent=5 // pred_check_branch
        %303 = sbr.rel (%p300) target = $region12
      $region11: #{tpu_custom_call.1} parent=5 // pred_region
        %s304 = ssub.s32 %s28, 1
        // Predicated region
        $region13: #{tpu_custom_call.1} parent=11 // pred_check
          %p305 = pneg %p75
        $region14: #{tpu_custom_call.1} parent=11 // pred_check_branch
          %307 = sbr.rel (%p305) target = $region16
        $region15: #{tpu_custom_call.1} parent=11 // pred_region
          %s309 = ssub.s32 1024, 1024
          %310 = vsyncadd [#allocation6], %s309
          %s311 = sshll.u32 [#allocation5], 4
          %s312 = int_to_ptr.vmem [resolvable:$true] %s311
          %317 = dma.hbm_to_vmem [thread:$0]  %s1, 1024, %s312, [#allocation6], 64, 64, 4
        $region16: #{tpu_custom_call.1} parent=11 // pred_fallthru
          _
        // Predicated region
        $region17: #{tpu_custom_call.1} parent=11 // pred_check
          %p318 = pneg %p96
        $region18: #{tpu_custom_call.1} parent=11 // pred_check_branch
          %320 = sbr.rel (%p318) target = $region20
        $region19: #{tpu_custom_call.1} parent=11 // pred_region
          %s322 = ssub.s32 1024, 1024
          %323 = vsyncadd [#allocation6], %s322
          %s324 = sshll.u32 [#allocation7], 4
          %s325 = int_to_ptr.vmem [resolvable:$true] %s324
          %330 = dma.hbm_to_vmem [thread:$0]  %s2, 1024, %s325, [#allocation6], 64, 64, 4
        $region20: #{tpu_custom_call.1} parent=11 // pred_fallthru
          _
        // Predicated region
        $region21: #{tpu_custom_call.1} parent=11 // pred_check
          %p331 = pneg %p117
        $region22: #{tpu_custom_call.1} parent=11 // pred_check_branch
          %333 = sbr.rel (%p331) target = $region24
        $region23: #{tpu_custom_call.1} parent=11 // pred_region
          %s335 = ssub.s32 16, 16
          %336 = vsyncadd [#allocation9], %s335
          %s338 = sshll.u32 [#allocation8], 4
          %s339 = int_to_ptr.vmem [resolvable:$true] %s338
          %341 = dma.hbm_to_vmem [thread:$0]  %s3, 16, %s339, [#allocation9]
        $region24: #{tpu_custom_call.1} parent=11 // pred_fallthru
          _
        // Predicated region
        $region25: #{tpu_custom_call.1} parent=11 // pred_check
          %p342 = pneg %p138
        $region26: #{tpu_custom_call.1} parent=11 // pred_check_branch
          %344 = sbr.rel (%p342) target = $region28
        $region27: #{tpu_custom_call.1} parent=11 // pred_region
          %s346 = ssub.s32 16, 16
          %347 = vsyncadd [#allocation9], %s346
          %s349 = sshll.u32 [#allocation10], 4
          %s350 = int_to_ptr.vmem [resolvable:$true] %s349
          %352 = dma.hbm_to_vmem [thread:$0]  %s4, 16, %s350, [#allocation9]
        $region28: #{tpu_custom_call.1} parent=11 // pred_fallthru
          _
        // Predicated region
        $region29: #{tpu_custom_call.1} parent=11 // pred_check
          %p353 = pneg %p159
        $region30: #{tpu_custom_call.1} parent=11 // pred_check_branch
          %355 = sbr.rel (%p353) target = $region32
        $region31: #{tpu_custom_call.1} parent=11 // pred_region
          %s357 = ssub.s32 16, 16
          %358 = vsyncadd [#allocation12], %s357
          %s360 = sshll.u32 [#allocation11], 4
          %s361 = int_to_ptr.vmem [resolvable:$true] %s360
          %363 = dma.hbm_to_vmem [thread:$0]  %s5, 16, %s361, [#allocation12]
        $region32: #{tpu_custom_call.1} parent=11 // pred_fallthru
          _
        // Predicated region
        $region33: #{tpu_custom_call.1} parent=11 // pred_check
          %p364 = pneg %p180
        $region34: #{tpu_custom_call.1} parent=11 // pred_check_branch
          %366 = sbr.rel (%p364) target = $region36
        $region35: #{tpu_custom_call.1} parent=11 // pred_region
          %s368 = ssub.s32 16, 16
          %369 = vsyncadd [#allocation12], %s368
          %s371 = sshll.u32 [#allocation13], 4
          %s372 = int_to_ptr.vmem [resolvable:$true] %s371
          %374 = dma.hbm_to_vmem [thread:$0]  %s6, 16, %s372, [#allocation12]
        $region36: #{tpu_custom_call.1} parent=11 // pred_fallthru
          _
        // Predicated region
        $region37: #{tpu_custom_call.1} parent=11 // pred_check
          %p375 = pneg %p201
        $region38: #{tpu_custom_call.1} parent=11 // pred_check_branch
          %377 = sbr.rel (%p375) target = $region40
        $region39: #{tpu_custom_call.1} parent=11 // pred_region
          %s379 = ssub.s32 256, 256
          %380 = vsyncadd [#allocation15], %s379
          %s381 = sshll.u32 [#allocation14], 4
          %s382 = int_to_ptr.vmem [resolvable:$true] %s381
          %387 = dma.hbm_to_vmem [thread:$0]  %s7, 256, %s382, [#allocation15], 64, 64, 4
        $region40: #{tpu_custom_call.1} parent=11 // pred_fallthru
          _
        // Predicated region
        $region41: #{tpu_custom_call.1} parent=11 // pred_check
          %p388 = pneg %p222
        $region42: #{tpu_custom_call.1} parent=11 // pred_check_branch
          %390 = sbr.rel (%p388) target = $region44
        $region43: #{tpu_custom_call.1} parent=11 // pred_region
          %s392 = ssub.s32 16, 16
          %393 = vsyncadd [#allocation15], %s392
          %s395 = sshll.u32 [#allocation16], 4
          %s396 = int_to_ptr.vmem [resolvable:$true] %s395
          %398 = dma.hbm_to_vmem [thread:$0]  %s8, 16, %s396, [#allocation15]
        $region44: #{tpu_custom_call.1} parent=11 // pred_fallthru
          _
        // Predicated region
        $region45: #{tpu_custom_call.1} parent=11 // pred_check
          %p399 = pneg %p243
        $region46: #{tpu_custom_call.1} parent=11 // pred_check_branch
          %401 = sbr.rel (%p399) target = $region48
        $region47: #{tpu_custom_call.1} parent=11 // pred_region
          %s403 = ssub.s32 256, 256
          %404 = vsyncadd [#allocation18], %s403
          %s405 = sshll.u32 [#allocation17], 4
          %s406 = int_to_ptr.vmem [resolvable:$true] %s405
          %411 = dma.hbm_to_vmem [thread:$0]  %s9, 256, %s406, [#allocation18], 64, 64, 4
        $region48: #{tpu_custom_call.1} parent=11 // pred_fallthru
          _
        // Predicated region
        $region49: #{tpu_custom_call.1} parent=11 // pred_check
          %p412 = pneg %p264
        $region50: #{tpu_custom_call.1} parent=11 // pred_check_branch
          %414 = sbr.rel (%p412) target = $region52
        $region51: #{tpu_custom_call.1} parent=11 // pred_region
          %s416 = ssub.s32 16, 16
          %417 = vsyncadd [#allocation18], %s416
          %s419 = sshll.u32 [#allocation19], 4
          %s420 = int_to_ptr.vmem [resolvable:$true] %s419
          %422 = dma.hbm_to_vmem [thread:$0]  %s10, 16, %s420, [#allocation18]
        $region52: #{tpu_custom_call.1} parent=11 // pred_fallthru
          _
      $region12: #{tpu_custom_call.1} parent=5 // pred_fallthru
        _
      %p423 = scmp.lt.s32.totalorder %s28, 2
      // Predicated region
      $region53: #{tpu_custom_call.1} parent=5 // pred_check
        %p424 = pneg %p423
      $region54: #{tpu_custom_call.1} parent=5 // pred_check_branch
        %426 = sbr.rel (%p424) target = $region56
      $region55: #{tpu_custom_call.1} parent=5 // pred_region
        // Predicated region
        $region57: #{tpu_custom_call.1} parent=55 // pred_check
          %p427 = pneg %p48
        $region58: #{tpu_custom_call.1} parent=55 // pred_check_branch
          %429 = sbr.rel (%p427) target = $region60
        $region59: #{tpu_custom_call.1} parent=55 // pred_region
          %s430 = sand.u32 %s38, 1
          %s431 = scalar_lea.sflag [#allocation3], %s430
          %s432 = sand.u32 %s38, 1
          %s433 = smul.addr %s432, 4
          %s434 = scalar_lea.vmem [#allocation2], %s433
          %s436 = ssub.s32 64, 64
          %437 = vsyncadd %s431, %s436
          %s438 = smul.addr %s28, 64
          %s439 = scalar_lea.hbm %s0, %s438
          %s441 = sshll.u32 %s434, 4
          %s442 = int_to_ptr.vmem [resolvable:$true] %s441
          %444 = dma.hbm_to_vmem [thread:$0]  %s439, 64, %s442, %s431
        $region60: #{tpu_custom_call.1} parent=55 // pred_fallthru
          _
      $region56: #{tpu_custom_call.1} parent=5 // pred_fallthru
        _
      %p445 = scmp.le.s32.totalorder 1, %s28
      %p446 = scmp.lt.s32.totalorder %s28, 3
      %p447 = pnand %p445, %p446
      %p448 = pneg %p447
      // Predicated region
      $region61: #{tpu_custom_call.1} parent=5 // pred_check
        _
      $region62: #{tpu_custom_call.1} parent=5 // pred_check_branch
        %450 = sbr.rel (%p447) target = $region64
      $region63: #{tpu_custom_call.1} parent=5 // pred_region
        %s451 = ssub.s32 %s28, 1
        %s452 = sand.u32 %s41, 1
        %s453 = scalar_lea.sflag [#allocation3], %s452
        %s454 = sand.u32 %s41, 1
        %s455 = smul.addr %s454, 4
        %s456 = scalar_lea.vmem [#allocation2], %s455
        // Predicated region
        $region65: #{tpu_custom_call.1} parent=63 // pred_check
          %p457 = pneg %p54
        $region66: #{tpu_custom_call.1} parent=63 // pred_check_branch
          %459 = sbr.rel (%p457) target = $region68
        $region67: #{tpu_custom_call.1} parent=63 // pred_region
          %460 = dma.done %s453, 64
        $region68: #{tpu_custom_call.1} parent=63 // pred_fallthru
          _
        // Predicated region
        $region69: #{tpu_custom_call.1} parent=63 // pred_check
          %p461 = pneg %p75
        $region70: #{tpu_custom_call.1} parent=63 // pred_check_branch
          %463 = sbr.rel (%p461) target = $region72
        $region71: #{tpu_custom_call.1} parent=63 // pred_region
          %464 = dma.done [#allocation6], 1024
        $region72: #{tpu_custom_call.1} parent=63 // pred_fallthru
          _
        // Predicated region
        $region73: #{tpu_custom_call.1} parent=63 // pred_check
          %p465 = pneg %p96
        $region74: #{tpu_custom_call.1} parent=63 // pred_check_branch
          %467 = sbr.rel (%p465) target = $region76
        $region75: #{tpu_custom_call.1} parent=63 // pred_region
          %468 = dma.done [#allocation6], 1024
        $region76: #{tpu_custom_call.1} parent=63 // pred_fallthru
          _
        // Predicated region
        $region77: #{tpu_custom_call.1} parent=63 // pred_check
          %p469 = pneg %p117
        $region78: #{tpu_custom_call.1} parent=63 // pred_check_branch
          %471 = sbr.rel (%p469) target = $region80
        $region79: #{tpu_custom_call.1} parent=63 // pred_region
          %472 = dma.done [#allocation9], 16
        $region80: #{tpu_custom_call.1} parent=63 // pred_fallthru
          _
        // Predicated region
        $region81: #{tpu_custom_call.1} parent=63 // pred_check
          %p473 = pneg %p138
        $region82: #{tpu_custom_call.1} parent=63 // pred_check_branch
          %475 = sbr.rel (%p473) target = $region84
        $region83: #{tpu_custom_call.1} parent=63 // pred_region
          %476 = dma.done [#allocation9], 16
        $region84: #{tpu_custom_call.1} parent=63 // pred_fallthru
          _
        // Predicated region
        $region85: #{tpu_custom_call.1} parent=63 // pred_check
          %p477 = pneg %p159
        $region86: #{tpu_custom_call.1} parent=63 // pred_check_branch
          %479 = sbr.rel (%p477) target = $region88
        $region87: #{tpu_custom_call.1} parent=63 // pred_region
          %480 = dma.done [#allocation12], 16
        $region88: #{tpu_custom_call.1} parent=63 // pred_fallthru
          _
        // Predicated region
        $region89: #{tpu_custom_call.1} parent=63 // pred_check
          %p481 = pneg %p180
        $region90: #{tpu_custom_call.1} parent=63 // pred_check_branch
          %483 = sbr.rel (%p481) target = $region92
        $region91: #{tpu_custom_call.1} parent=63 // pred_region
          %484 = dma.done [#allocation12], 16
        $region92: #{tpu_custom_call.1} parent=63 // pred_fallthru
          _
        // Predicated region
        $region93: #{tpu_custom_call.1} parent=63 // pred_check
          %p485 = pneg %p201
        $region94: #{tpu_custom_call.1} parent=63 // pred_check_branch
          %487 = sbr.rel (%p485) target = $region96
        $region95: #{tpu_custom_call.1} parent=63 // pred_region
          %488 = dma.done [#allocation15], 256
        $region96: #{tpu_custom_call.1} parent=63 // pred_fallthru
          _
        // Predicated region
        $region97: #{tpu_custom_call.1} parent=63 // pred_check
          %p489 = pneg %p222
        $region98: #{tpu_custom_call.1} parent=63 // pred_check_branch
          %491 = sbr.rel (%p489) target = $region100
        $region99: #{tpu_custom_call.1} parent=63 // pred_region
          %492 = dma.done [#allocation15], 16
        $region100: #{tpu_custom_call.1} parent=63 // pred_fallthru
          _
        // Predicated region
        $region101: #{tpu_custom_call.1} parent=63 // pred_check
          %p493 = pneg %p243
        $region102: #{tpu_custom_call.1} parent=63 // pred_check_branch
          %495 = sbr.rel (%p493) target = $region104
        $region103: #{tpu_custom_call.1} parent=63 // pred_region
          %496 = dma.done [#allocation18], 256
        $region104: #{tpu_custom_call.1} parent=63 // pred_fallthru
          _
        // Predicated region
        $region105: #{tpu_custom_call.1} parent=63 // pred_check
          %p497 = pneg %p264
        $region106: #{tpu_custom_call.1} parent=63 // pred_check_branch
          %499 = sbr.rel (%p497) target = $region108
        $region107: #{tpu_custom_call.1} parent=63 // pred_region
          %500 = dma.done [#allocation18], 16
        $region108: #{tpu_custom_call.1} parent=63 // pred_fallthru
          _
        %s501 = sand.u32 %s41, 1
        %s502 = scalar_lea.sflag [#allocation3], %s501
        %s503 = sand.u32 %s41, 1
        %s504 = smul.addr %s503, 4
        %s505 = scalar_lea.vmem [#allocation2], %s504
        %p506 = pneg %p54
        %p507 = pneg %p51
        %p508 = pneg %p75
        %p509 = pneg %p72
        %p510 = pneg %p96
        %p511 = pneg %p93
        %p512 = pneg %p117
        %p513 = pneg %p114
        %p514 = pneg %p138
        %p515 = pneg %p135
        %p516 = pneg %p159
        %p517 = pneg %p156
        %p518 = pneg %p180
        %p519 = pneg %p177
        %p520 = pneg %p201
        %p521 = pneg %p198
        %p522 = pneg %p222
        %p523 = pneg %p219
        %p524 = pneg %p243
        %p525 = pneg %p240
        %p526 = pneg %p264
        %p527 = pneg %p261
        %p528 = pneg %p290
        %p529 = pneg %p287
        %s530 = sand.u32 %s277, 1
        %s531 = scalar_lea.sflag [#allocation4], %s530
        %s532 = sand.u32 %s277, 1
        %s533 = smul.addr %s532, 8
        %s534 = scalar_lea.vmem [#allocation20], %s533
        %v536 = vld [vmem:[%s456] sm:$0xf]
        %v537 = vld [vmem:[#allocation5] sm:$0xf]
        %v538 = vld [vmem:[#allocation5 + $0x4] sm:$0xf]
        %v539 = vld [vmem:[#allocation5 + $0x8] sm:$0xf]
        %v540 = vld [vmem:[#allocation5 + $0xc] sm:$0xf]
        %v541 = vld [vmem:[#allocation5 + $0x10] sm:$0xf]
        %v542 = vld [vmem:[#allocation5 + $0x14] sm:$0xf]
        %v543 = vld [vmem:[#allocation5 + $0x18] sm:$0xf]
        %v544 = vld [vmem:[#allocation5 + $0x1c] sm:$0xf]
        %v545 = vld [vmem:[#allocation5 + $0x20] sm:$0xf]
        %v546 = vld [vmem:[#allocation5 + $0x24] sm:$0xf]
        %v547 = vld [vmem:[#allocation5 + $0x28] sm:$0xf]
        %v548 = vld [vmem:[#allocation5 + $0x2c] sm:$0xf]
        %v549 = vld [vmem:[#allocation5 + $0x30] sm:$0xf]
        %v550 = vld [vmem:[#allocation5 + $0x34] sm:$0xf]
        %v551 = vld [vmem:[#allocation5 + $0x38] sm:$0xf]
        %v552 = vld [vmem:[#allocation5 + $0x3c] sm:$0xf]
        %v553 = vld [vmem:[#allocation8] sm:$0x1]
        %v555 = vlaneseq
        %v556 = vshrl.u32 %v555, 7
        %v557 = vsub.s32 0, %v556
        %v558 = vrot.slane %v553, %v557
        %v576 = vunpack.c.l.b16 %v537
        %v577 = vunpack.c.l.b16 %v538
        %v578 = vunpack.c.l.b16 %v539
        %v579 = vunpack.c.l.b16 %v540
        %v580 = vunpack.c.l.b16 %v541
        %v581 = vunpack.c.l.b16 %v542
        %v582 = vunpack.c.l.b16 %v543
        %v583 = vunpack.c.l.b16 %v544
        %v584 = vunpack.c.l.b16 %v545
        %v585 = vunpack.c.l.b16 %v546
        %v586 = vunpack.c.l.b16 %v547
        %v587 = vunpack.c.l.b16 %v548
        %v588 = vunpack.c.l.b16 %v549
        %v589 = vunpack.c.l.b16 %v550
        %v590 = vunpack.c.l.b16 %v551
        %v591 = vunpack.c.l.b16 %v552
        %v592 = vpack.c.b16 %v577, %v576
        %v593 = vpack.c.b16 %v579, %v578
        %v594 = vpack.c.b16 %v581, %v580
        %v595 = vpack.c.b16 %v583, %v582
        %v596 = vpack.c.b16 %v585, %v584
        %v597 = vpack.c.b16 %v587, %v586
        %v598 = vpack.c.b16 %v589, %v588
        %v599 = vpack.c.b16 %v591, %v590
        %608 = vmatprep.subr.bf16.mxu0 0
        %609 = vmatpush1.bf16.msra.mxu0 %v592
        %610 = vmatprep.subr.bf16.mxu0 0
        %611 = vmatpush1.bf16.msra.mxu0 %v593
        %612 = vmatprep.subr.bf16.mxu0 0
        %613 = vmatpush1.bf16.msra.mxu0 %v594
        %614 = vmatprep.subr.bf16.mxu0 0
        %615 = vmatpush1.bf16.msra.mxu0 %v595
        %616 = vmatprep.subr.bf16.mxu0 0
        %617 = vmatpush1.bf16.msra.mxu0 %v596
        %618 = vmatprep.subr.bf16.mxu0 0
        %619 = vmatpush1.bf16.msra.mxu0 %v597
        %620 = vmatprep.subr.bf16.mxu0 0
        %621 = vmatpush1.bf16.msra.mxu0 %v598
        %622 = vmatprep.subr.bf16.mxu0 0
        %623 = vmatpush1.bf16.msra.mxu0 %v599
        %624 = vmatprep.subr.bf16.mxu0 0
        %625 = vmatpush1.bf16.msra.mxu0 0
        %626 = vmatprep.subr.bf16.mxu0 0
        %627 = vmatpush1.bf16.msra.mxu0 0
        %628 = vmatprep.subr.bf16.mxu0 0
        %629 = vmatpush1.bf16.msra.mxu0 0
        %630 = vmatprep.subr.bf16.mxu0 0
        %631 = vmatpush1.bf16.msra.mxu0 0
        %632 = vmatprep.subr.bf16.mxu0 0
        %633 = vmatpush1.bf16.msra.mxu0 0
        %634 = vmatprep.subr.bf16.mxu0 0
        %635 = vmatpush1.bf16.msra.mxu0 0
        %636 = vmatprep.subr.bf16.mxu0 0
        %637 = vmatpush1.bf16.msra.mxu0 0
        %638 = vmatprep.subr.bf16.mxu0 0
        %639 = vmatpush1.bf16.msra.mxu0 0
        %640 = vmatprep.mubr.bf16.mxu0 0
        %641 = vmatmul.mubr.bf16.gmra.mrb[0].mxu0 %v536
        %v642 = vpop.f32.mrb[0].mxu0
        %v643 = vadd.f32 %v558, %v642
        %v644 = vpop.f32.mrb[0].mxu0
        %v645 = vpop.f32.mrb[0].mxu0
        %v646 = vpop.f32.mrb[0].mxu0
        %647 = vdwg.mxu0
        %v648 = vld [vmem:[#allocation7] sm:$0xf]
        %v649 = vld [vmem:[#allocation7 + $0x4] sm:$0xf]
        %v650 = vld [vmem:[#allocation7 + $0x8] sm:$0xf]
        %v651 = vld [vmem:[#allocation7 + $0xc] sm:$0xf]
        %v652 = vld [vmem:[#allocation7 + $0x10] sm:$0xf]
        %v653 = vld [vmem:[#allocation7 + $0x14] sm:$0xf]
        %v654 = vld [vmem:[#allocation7 + $0x18] sm:$0xf]
        %v655 = vld [vmem:[#allocation7 + $0x1c] sm:$0xf]
        %v656 = vld [vmem:[#allocation7 + $0x20] sm:$0xf]
        %v657 = vld [vmem:[#allocation7 + $0x24] sm:$0xf]
        %v658 = vld [vmem:[#allocation7 + $0x28] sm:$0xf]
        %v659 = vld [vmem:[#allocation7 + $0x2c] sm:$0xf]
        %v660 = vld [vmem:[#allocation7 + $0x30] sm:$0xf]
        %v661 = vld [vmem:[#allocation7 + $0x34] sm:$0xf]
        %v662 = vld [vmem:[#allocation7 + $0x38] sm:$0xf]
        %v663 = vld [vmem:[#allocation7 + $0x3c] sm:$0xf]
        %v664 = vld [vmem:[#allocation10] sm:$0x1]
        %v666 = vlaneseq
        %v667 = vshrl.u32 %v666, 7
        %v668 = vsub.s32 0, %v667
        %v669 = vrot.slane %v664, %v668
        %v687 = vunpack.c.l.b16 %v648
        %v688 = vunpack.c.l.b16 %v649
        %v689 = vunpack.c.l.b16 %v650
        %v690 = vunpack.c.l.b16 %v651
        %v691 = vunpack.c.l.b16 %v652
        %v692 = vunpack.c.l.b16 %v653
        %v693 = vunpack.c.l.b16 %v654
        %v694 = vunpack.c.l.b16 %v655
        %v695 = vunpack.c.l.b16 %v656
        %v696 = vunpack.c.l.b16 %v657
        %v697 = vunpack.c.l.b16 %v658
        %v698 = vunpack.c.l.b16 %v659
        %v699 = vunpack.c.l.b16 %v660
        %v700 = vunpack.c.l.b16 %v661
        %v701 = vunpack.c.l.b16 %v662
        %v702 = vunpack.c.l.b16 %v663
        %v703 = vpack.c.b16 %v688, %v687
        %v704 = vpack.c.b16 %v690, %v689
        %v705 = vpack.c.b16 %v692, %v691
        %v706 = vpack.c.b16 %v694, %v693
        %v707 = vpack.c.b16 %v696, %v695
        %v708 = vpack.c.b16 %v698, %v697
        %v709 = vpack.c.b16 %v700, %v699
        %v710 = vpack.c.b16 %v702, %v701
        %719 = vmatprep.subr.bf16.mxu0 0
        %720 = vmatpush1.bf16.msra.mxu0 %v703
        %721 = vmatprep.subr.bf16.mxu0 0
        %722 = vmatpush1.bf16.msra.mxu0 %v704
        %723 = vmatprep.subr.bf16.mxu0 0
        %724 = vmatpush1.bf16.msra.mxu0 %v705
        %725 = vmatprep.subr.bf16.mxu0 0
        %726 = vmatpush1.bf16.msra.mxu0 %v706
        %727 = vmatprep.subr.bf16.mxu0 0
        %728 = vmatpush1.bf16.msra.mxu0 %v707
        %729 = vmatprep.subr.bf16.mxu0 0
        %730 = vmatpush1.bf16.msra.mxu0 %v708
        %731 = vmatprep.subr.bf16.mxu0 0
        %732 = vmatpush1.bf16.msra.mxu0 %v709
        %733 = vmatprep.subr.bf16.mxu0 0
        %734 = vmatpush1.bf16.msra.mxu0 %v710
        %735 = vmatprep.subr.bf16.mxu0 0
        %736 = vmatpush1.bf16.msra.mxu0 0
        %737 = vmatprep.subr.bf16.mxu0 0
        %738 = vmatpush1.bf16.msra.mxu0 0
        %739 = vmatprep.subr.bf16.mxu0 0
        %740 = vmatpush1.bf16.msra.mxu0 0
        %741 = vmatprep.subr.bf16.mxu0 0
        %742 = vmatpush1.bf16.msra.mxu0 0
        %743 = vmatprep.subr.bf16.mxu0 0
        %744 = vmatpush1.bf16.msra.mxu0 0
        %745 = vmatprep.subr.bf16.mxu0 0
        %746 = vmatpush1.bf16.msra.mxu0 0
        %747 = vmatprep.subr.bf16.mxu0 0
        %748 = vmatpush1.bf16.msra.mxu0 0
        %749 = vmatprep.subr.bf16.mxu0 0
        %750 = vmatpush1.bf16.msra.mxu0 0
        %751 = vmatprep.mubr.bf16.mxu0 0
        %752 = vmatmul.mubr.bf16.gmra.mrb[0].mxu0 %v536
        %v753 = vpop.f32.mrb[0].mxu0
        %v754 = vadd.f32 %v669, %v753
        %v755 = vpop.f32.mrb[0].mxu0
        %v756 = vpop.f32.mrb[0].mxu0
        %v757 = vpop.f32.mrb[0].mxu0
        %758 = vdwg.mxu0
        %v759 = vmul.f32 %v643, 0.5
        %v760 = vmul.f32 %v643, 0.70710677
        %vm761 = vcmp.ge.f32.partialorder %v760, 0.0
        %v762 = vsel %vm761, 1.0, -1.0
        %v763 = vand.u32 2147483647, %v760
        %v764 = vmul.f32 %v763, 0.3275911
        %v765 = vadd.f32 %v764, 1.0
        %v766 = vrcp.pop %v765
        %v767 = vmul.f32 1.0, %v766
        %v768 = vmul.f32 %v767, 1.0614054
        %v769 = vadd.f32 %v768, -1.4531521
        %v770 = vmul.f32 %v767, %v769
        %v771 = vadd.f32 %v770, 1.4214138
        %v772 = vmul.f32 %v767, %v771
        %v773 = vadd.f32 %v772, -0.28449672
        %v774 = vmul.f32 %v767, %v773
        %v775 = vadd.f32 %v774, 0.2548296
        %v776 = vmul.f32 %v767, %v775
        %v777 = vsub.f32 0.0, %v763
        %v778 = vmul.f32 %v777, %v763
        %v779 = vmul.f32 %v778, 1.442695
        %v780 = vpow.pop %v779
        %v781 = vmul.f32 %v776, %v780
        %v782 = vsub.f32 1.0, %v781
        %v783 = vmul.f32 %v762, %v782
        %v784 = vadd.f32 %v783, 1.0
        %v785 = vmul.f32 %v759, %v784
        %v786 = vmul.f32 %v754, 0.5
        %v787 = vmul.f32 %v754, 0.70710677
        %vm788 = vcmp.ge.f32.partialorder %v787, 0.0
        %v789 = vsel %vm788, 1.0, -1.0
        %v790 = vand.u32 2147483647, %v787
        %v791 = vmul.f32 %v790, 0.3275911
        %v792 = vadd.f32 %v791, 1.0
        %v793 = vrcp.pop %v792
        %v794 = vmul.f32 1.0, %v793
        %v795 = vmul.f32 %v794, 1.0614054
        %v796 = vadd.f32 %v795, -1.4531521
        %v797 = vmul.f32 %v794, %v796
        %v798 = vadd.f32 %v797, 1.4214138
        %v799 = vmul.f32 %v794, %v798
        %v800 = vadd.f32 %v799, -0.28449672
        %v801 = vmul.f32 %v794, %v800
        %v802 = vadd.f32 %v801, 0.2548296
        %v803 = vmul.f32 %v794, %v802
        %v804 = vsub.f32 0.0, %v790
        %v805 = vmul.f32 %v804, %v790
        %v806 = vmul.f32 %v805, 1.442695
        %v807 = vpow.pop %v806
        %v808 = vmul.f32 %v803, %v807
        %v809 = vsub.f32 1.0, %v808
        %v810 = vmul.f32 %v789, %v809
        %v811 = vadd.f32 %v810, 1.0
        %v812 = vmul.f32 %v786, %v811
        %vm813 = vcmask 261120
        %v814 = vsel %vm813, %v812, 0.0
        %815 = vadd.xlane.f32.xlu0 %v814
        %v816 = vpop.xlane.xlu0 %815
        %v817 = vmul.f32 %v816, 0.03125
        %v818 = vsub.f32 %v812, %v817
        %v819 = vmul.f32 %v818, %v818
        %v820 = vsel %vm813, %v819, 0.0
        %821 = vadd.xlane.f32.xlu0 %v820
        %v822 = vpop.xlane.xlu0 %821
        %v823 = vmul.f32 %v822, 0.03125
        %v824 = vadd.f32 %v823, 1e-05
        %v825 = vrsqrt.pop %v824
        %v826 = vmul.f32 %v818, %v825
        %v827 = vld [vmem:[#allocation11] sm:$0x1]
        %v829 = vlaneseq
        %v830 = vshrl.u32 %v829, 7
        %v831 = vsub.s32 0, %v830
        %v832 = vrot.slane %v827, %v831
        %v834 = vmul.f32 %v826, %v832
        %v835 = vld [vmem:[#allocation13] sm:$0x1]
        %v837 = vlaneseq
        %v838 = vshrl.u32 %v837, 7
        %v839 = vsub.s32 0, %v838
        %v840 = vrot.slane %v835, %v839
        %v842 = vadd.f32 %v834, %v840
        %v843 = vpack.c.bf16 %v842, %v842
        %v844 = vld [vmem:[#allocation14] sm:$0xf]
        %v845 = vld [vmem:[#allocation14 + $0x4] sm:$0xf]
        %v846 = vld [vmem:[#allocation14 + $0x8] sm:$0xf]
        %v847 = vld [vmem:[#allocation14 + $0xc] sm:$0xf]
        %v848 = vld [vmem:[#allocation16] sm:$0x1]
        %v850 = vlaneseq
        %v851 = vshrl.u32 %v850, 7
        %v852 = vsub.s32 0, %v851
        %v853 = vrot.slane %v848, %v852
        %v859 = vunpack.c.l.b16 %v844
        %v860 = vunpack.c.l.b16 %v845
        %v861 = vunpack.c.l.b16 %v846
        %v862 = vunpack.c.l.b16 %v847
        %v863 = vpack.c.b16 %v860, %v859
        %v864 = vpack.c.b16 %v862, %v861
        %v868 = vsel %vm813, %v843, 0
        %870 = vmatprep.subr.bf16.mxu0 0
        %871 = vmatpush1.bf16.msra.mxu0 %v863
        %872 = vmatprep.subr.bf16.mxu0 0
        %873 = vmatpush1.bf16.msra.mxu0 %v864
        %874 = vmatprep.subr.bf16.mxu0 0
        %875 = vmatpush1.bf16.msra.mxu0 0
        %876 = vmatprep.subr.bf16.mxu0 0
        %877 = vmatpush1.bf16.msra.mxu0 0
        %878 = vmatprep.subr.bf16.mxu0 0
        %879 = vmatpush1.bf16.msra.mxu0 0
        %880 = vmatprep.subr.bf16.mxu0 0
        %881 = vmatpush1.bf16.msra.mxu0 0
        %882 = vmatprep.subr.bf16.mxu0 0
        %883 = vmatpush1.bf16.msra.mxu0 0
        %884 = vmatprep.subr.bf16.mxu0 0
        %885 = vmatpush1.bf16.msra.mxu0 0
        %886 = vmatprep.subr.bf16.mxu0 0
        %887 = vmatpush1.bf16.msra.mxu0 0
        %888 = vmatprep.subr.bf16.mxu0 0
        %889 = vmatpush1.bf16.msra.mxu0 0
        %890 = vmatprep.subr.bf16.mxu0 0
        %891 = vmatpush1.bf16.msra.mxu0 0
        %892 = vmatprep.subr.bf16.mxu0 0
        %893 = vmatpush1.bf16.msra.mxu0 0
        %894 = vmatprep.subr.bf16.mxu0 0
        %895 = vmatpush1.bf16.msra.mxu0 0
        %896 = vmatprep.subr.bf16.mxu0 0
        %897 = vmatpush1.bf16.msra.mxu0 0
        %898 = vmatprep.subr.bf16.mxu0 0
        %899 = vmatpush1.bf16.msra.mxu0 0
        %900 = vmatprep.subr.bf16.mxu0 0
        %901 = vmatpush1.bf16.msra.mxu0 0
        %902 = vmatprep.mubr.bf16.mxu0 0
        %903 = vmatmul.mubr.bf16.gmra.mrb[0].mxu0 %v868
        %v904 = vpop.f32.mrb[0].mxu0
        %v905 = vadd.f32 %v853, %v904
        %v906 = vpop.f32.mrb[0].mxu0
        %v907 = vpop.f32.mrb[0].mxu0
        %v908 = vpop.f32.mrb[0].mxu0
        %909 = vdwg.mxu0
        %v910 = vpack.c.bf16 %v905, %v905
        %v911 = vpack.c.bf16 %v785, %v785
        %vm912 = vcmask 64512
        %v914 = vsel %vm912, %v910, 0
        %vm916 = vcmask 1043456
        %v918 = vsel %vm916, %v911, 0
        %920 = vmatprep.subr.bf16.mxu0 0
        %921 = vmatpush1.bf16.msra.mxu0 %v918
        %922 = vmatprep.subr.bf16.mxu0 0
        %923 = vmatpush1.bf16.msra.mxu0 0
        %924 = vmatprep.subr.bf16.mxu0 0
        %925 = vmatpush1.bf16.msra.mxu0 0
        %926 = vmatprep.subr.bf16.mxu0 0
        %927 = vmatpush1.bf16.msra.mxu0 0
        %928 = vmatprep.subr.bf16.mxu0 0
        %929 = vmatpush1.bf16.msra.mxu0 0
        %930 = vmatprep.subr.bf16.mxu0 0
        %931 = vmatpush1.bf16.msra.mxu0 0
        %932 = vmatprep.subr.bf16.mxu0 0
        %933 = vmatpush1.bf16.msra.mxu0 0
        %934 = vmatprep.subr.bf16.mxu0 0
        %935 = vmatpush1.bf16.msra.mxu0 0
        %936 = vmatprep.subr.bf16.mxu0 0
        %937 = vmatpush1.bf16.msra.mxu0 0
        %938 = vmatprep.subr.bf16.mxu0 0
        %939 = vmatpush1.bf16.msra.mxu0 0
        %940 = vmatprep.subr.bf16.mxu0 0
        %941 = vmatpush1.bf16.msra.mxu0 0
        %942 = vmatprep.subr.bf16.mxu0 0
        %943 = vmatpush1.bf16.msra.mxu0 0
        %944 = vmatprep.subr.bf16.mxu0 0
        %945 = vmatpush1.bf16.msra.mxu0 0
        %946 = vmatprep.subr.bf16.mxu0 0
        %947 = vmatpush1.bf16.msra.mxu0 0
        %948 = vmatprep.subr.bf16.mxu0 0
        %949 = vmatpush1.bf16.msra.mxu0 0
        %950 = vmatprep.subr.bf16.mxu0 0
        %951 = vmatpush1.bf16.msra.mxu0 0
        %952 = vmatprep.mubr.bf16.mxu0 0
        %953 = vmatmul.mubr.bf16.gmra.mrb[0].mxu0 %v914
        %v954 = vpop.f32.mrb[0].mxu0
        %v955 = vadd.f32 0.0, %v954
        %v956 = vpop.f32.mrb[0].mxu0
        %v957 = vpop.f32.mrb[0].mxu0
        %v958 = vpop.f32.mrb[0].mxu0
        %959 = vdwg.mxu0
        %v960 = vpack.c.bf16 %v955, %v955
        %v961 = vld [vmem:[#allocation17] sm:$0xf]
        %v962 = vld [vmem:[#allocation17 + $0x4] sm:$0xf]
        %v963 = vld [vmem:[#allocation17 + $0x8] sm:$0xf]
        %v964 = vld [vmem:[#allocation17 + $0xc] sm:$0xf]
        %v965 = vld [vmem:[#allocation19] sm:$0x1]
        %v967 = vlaneseq
        %v968 = vshrl.u32 %v967, 7
        %v969 = vsub.s32 0, %v968
        %v970 = vrot.slane %v965, %v969
        %v976 = vunpack.c.l.b16 %v961
        %v977 = vunpack.c.l.b16 %v962
        %v978 = vunpack.c.l.b16 %v963
        %v979 = vunpack.c.l.b16 %v964
        %v980 = vpack.c.b16 %v977, %v976
        %v981 = vpack.c.b16 %v979, %v978
        %v985 = vsel %vm813, %v960, 0
        %987 = vmatprep.subr.bf16.mxu0 0
        %988 = vmatpush1.bf16.msra.mxu0 %v980
        %989 = vmatprep.subr.bf16.mxu0 0
        %990 = vmatpush1.bf16.msra.mxu0 %v981
        %991 = vmatprep.subr.bf16.mxu0 0
        %992 = vmatpush1.bf16.msra.mxu0 0
        %993 = vmatprep.subr.bf16.mxu0 0
        %994 = vmatpush1.bf16.msra.mxu0 0
        %995 = vmatprep.subr.bf16.mxu0 0
        %996 = vmatpush1.bf16.msra.mxu0 0
        %997 = vmatprep.subr.bf16.mxu0 0
        %998 = vmatpush1.bf16.msra.mxu0 0
        %999 = vmatprep.subr.bf16.mxu0 0
        %1000 = vmatpush1.bf16.msra.mxu0 0
        %1001 = vmatprep.subr.bf16.mxu0 0
        %1002 = vmatpush1.bf16.msra.mxu0 0
        %1003 = vmatprep.subr.bf16.mxu0 0
        %1004 = vmatpush1.bf16.msra.mxu0 0
        %1005 = vmatprep.subr.bf16.mxu0 0
        %1006 = vmatpush1.bf16.msra.mxu0 0
        %1007 = vmatprep.subr.bf16.mxu0 0
        %1008 = vmatpush1.bf16.msra.mxu0 0
        %1009 = vmatprep.subr.bf16.mxu0 0
        %1010 = vmatpush1.bf16.msra.mxu0 0
        %1011 = vmatprep.subr.bf16.mxu0 0
        %1012 = vmatpush1.bf16.msra.mxu0 0
        %1013 = vmatprep.subr.bf16.mxu0 0
        %1014 = vmatpush1.bf16.msra.mxu0 0
        %1015 = vmatprep.subr.bf16.mxu0 0
        %1016 = vmatpush1.bf16.msra.mxu0 0
        %1017 = vmatprep.subr.bf16.mxu0 0
        %1018 = vmatpush1.bf16.msra.mxu0 0
        %1019 = vmatprep.mubr.bf16.mxu0 0
        %1020 = vmatmul.mubr.bf16.gmra.mrb[0].mxu0 %v985
        %v1021 = vpop.f32.mrb[0].mxu0
        %v1022 = vadd.f32 %v970, %v1021
        %v1023 = vpop.f32.mrb[0].mxu0
        %v1024 = vpop.f32.mrb[0].mxu0
        %v1025 = vpop.f32.mrb[0].mxu0
        %1026 = vdwg.mxu0
        %1027 = vst [vmem:[%s534] sm:$0xff] %v1022
        %s1028 = sand.u32 %s277, 1
        %s1029 = scalar_lea.sflag [#allocation4], %s1028
        %s1030 = sand.u32 %s277, 1
        %s1031 = smul.addr %s1030, 8
        %s1032 = scalar_lea.vmem [#allocation20], %s1031
        // Predicated region
        $region109: #{tpu_custom_call.1} parent=63 // pred_check
          %p1033 = pneg %p287
        $region110: #{tpu_custom_call.1} parent=63 // pred_check_branch
          %1035 = sbr.rel (%p1033) target = $region112
        $region111: #{tpu_custom_call.1} parent=63 // pred_region
          %s1037 = ssub.s32 128, 128
          %1038 = vsyncadd %s1029, %s1037
          %s1039 = smul.addr %s33, 128
          %s1040 = scalar_lea.hbm %s11, %s1039
          %s1042 = sshll.u32 %s1032, 4
          %s1043 = int_to_ptr.vmem [resolvable:$true] %s1042
          %1045 = dma.vmem_to_hbm [thread:$0]  %s1043, 128, %s1040, %s1029
        $region112: #{tpu_custom_call.1} parent=63 // pred_fallthru
          _
      $region64: #{tpu_custom_call.1} parent=5 // pred_fallthru
        _
      %p1046 = scmp.le.s32.totalorder 2, %s28
      // Predicated region
      $region113: #{tpu_custom_call.1} parent=5 // pred_check
        %p1047 = pneg %p1046
      $region114: #{tpu_custom_call.1} parent=5 // pred_check_branch
        %1049 = sbr.rel (%p1047) target = $region116
      $region115: #{tpu_custom_call.1} parent=5 // pred_region
        %s1050 = ssub.s32 %s28, 2
        // Predicated region
        $region117: #{tpu_custom_call.1} parent=115 // pred_check
          %p1051 = pneg %p293
        $region118: #{tpu_custom_call.1} parent=115 // pred_check_branch
          %1053 = sbr.rel (%p1051) target = $region120
        $region119: #{tpu_custom_call.1} parent=115 // pred_region
          %s1054 = sand.u32 %s278, 1
          %s1055 = scalar_lea.sflag [#allocation4], %s1054
          %s1056 = sand.u32 %s278, 1
          %s1057 = smul.addr %s1056, 8
          %s1058 = scalar_lea.vmem [#allocation20], %s1057
          %1059 = dma.done %s1055, 128
        $region120: #{tpu_custom_call.1} parent=115 // pred_fallthru
          _
      $region116: #{tpu_custom_call.1} parent=5 // pred_fallthru
        _
    $region6: #{tpu_custom_call.1} parent=1 // loop_footer
      %s32 = sadd.s32 1, %s28
    $region7: #{tpu_custom_call.1} parent=1 // loop_footer_branch
      %27 = sbr.rel target = $region3
    $region8: #{tpu_custom_call.1} parent=1 // loop_exit
      _
    %1060 = vsyncpa [#allocation3], 1
    %s1061 = scalar_lea.sflag [#allocation3], 1
    %1062 = vsyncpa %s1061, 1
    %1063 = vsyncpa [#allocation6], 1
    %1064 = vsyncpa [#allocation9], 1
    %1065 = vsyncpa [#allocation12], 1
    %1066 = vsyncpa [#allocation15], 1
    %1067 = vsyncpa [#allocation18], 1
    %1068 = vsyncpa [#allocation4], 1
    %s1069 = scalar_lea.sflag [#allocation4], 1
    %1070 = vsyncpa %s1069, 1

</llo_original>
